<compile_context>
chip_gen: v5e
topology: v5e:2x2
jax: 0.10.0
libtpu: 0.0.40
codegen_flags: <defaults>
</compile_context>

<pallas_src>
import math
from functools import partial

import jax
import jax.numpy as jnp
from jax.experimental import pallas as pl
from jax.experimental.pallas import tpu as pltpu


_VMEM = pl.BlockSpec(memory_space=pltpu.MemorySpace.VMEM)


# ----------------------------------------------------------------------------
# Fused Pallas kernel
# ----------------------------------------------------------------------------
def _stgcn_block_kernel(x_ref, w1t0_ref, w1t1_ref, b1_ref, wfold_ref,
                        w2t0_ref, w2t1_ref, b2_ref, bnred_ref,
                        gamma_ref, beta_ref, o_ref,
                        *, bsz, n_nodes, t_in, c_in, c_sp, c_out):
    t1 = t_in - 1
    t2 = t_in - 2
    nci = n_nodes * c_in
    ncs = n_nodes * c_sp
    nco = n_nodes * c_out

    def sigmoid(z):                      # one EUP tanh push, exact in f32
        return 0.5 * jnp.tanh(0.5 * z) + 0.5

    # ---- temporal gated conv 1: two taps x one fused [lin|gate] matmul -----
    # x rows = (b, t), lanes = (node, cin); weights are node-block-diagonal
    # (N*Cin, 2*N*Cout) so the result stays lane-packed as (node, cout).
    x3 = x_ref[...]                                        # (B, T, N*Cin) bf16
    x_t0 = x3[:, :t1, :].reshape(bsz * t1, nci)
    x_t1 = x3[:, 1:, :].reshape(bsz * t1, nci)
    h1 = (jnp.dot(x_t0, w1t0_ref[...], preferred_element_type=jnp.float32)
          + jnp.dot(x_t1, w1t1_ref[...], preferred_element_type=jnp.float32)
          + b1_ref[...])                                   # (B*T1, 2*N*Cout) f32
    tb1 = h1[:, :nco] * sigmoid(h1[:, nco:])               # (B*T1, N*Cout) f32

    # ---- graph conv fused with spatial channel mixing: one K=N*Cout matmul --
    # wfold[(j,co),(i,cs)] = adj[i,j] * w_sp[co,cs]   (relu commutes to after)
    g = jnp.dot(tb1.astype(jnp.bfloat16), wfold_ref[...],
                preferred_element_type=jnp.float32)        # (B*T1, N*Cs)
    gconv = jnp.maximum(g, 0.0)                            # relu

    # ---- temporal gated conv 2: same two-tap fused structure ----------------
    g3 = gconv.astype(jnp.bfloat16).reshape(bsz, t1, ncs)
    g_t0 = g3[:, :t2, :].reshape(bsz * t2, ncs)
    g_t1 = g3[:, 1:, :].reshape(bsz * t2, ncs)
    h2 = (jnp.dot(g_t0, w2t0_ref[...], preferred_element_type=jnp.float32)
          + jnp.dot(g_t1, w2t1_ref[...], preferred_element_type=jnp.float32)
          + b2_ref[...])                                   # (B*T2, 2*N*Cout) f32
    tb2 = h2[:, :nco] * sigmoid(h2[:, nco:])               # (B*T2, N*Cout) f32

    # ---- BatchNorm2d over nodes (training-mode batch statistics) ------------
    # Sublane-reduce over rows, then a tiny f32 matmul with a block-diagonal
    # ones matrix performs the within-node lane-group sum AND broadcasts it
    # back to every (node, cout) lane — everything stays lane-dense.
    s = jnp.sum(tb2, axis=0, keepdims=True)                # (1, N*Cout)
    ss = jnp.sum(tb2 * tb2, axis=0, keepdims=True)         # (1, N*Cout)
    moments = jnp.concatenate([s, ss], axis=0)             # (2, N*Cout)
    red = jnp.dot(moments, bnred_ref[...],
                  preferred_element_type=jnp.float32) / float(bsz * t2 * c_out)
    mean = red[0:1, :]                                     # (1, N*Cout)
    var = jnp.maximum(red[1:2, :] - mean * mean, 0.0)      # clamp cancellation
    scale = gamma_ref[...] * jax.lax.rsqrt(var + 1e-5)     # (1, N*Cout)
    o_ref[...] = (tb2 - mean) * scale + beta_ref[...]      # lane-dense store


# ----------------------------------------------------------------------------
# One-time parameter preparation (outside the jitted forward)
# ----------------------------------------------------------------------------
def prepare_params(params, adj_hat):
    """Fold the (1,2) Conv2d kernels into node-block-diagonal, lane-major,
    lin/gate-fused bf16 matmul weights; fold adj_hat ⊗ w_sp into one matrix;
    build the BN node-group reduce matrix and lane-tiled affine params."""
    w1a, w1b = params["w1a"], params["w1b"]                # (Cout, Cin, 1, 2)
    w2a, w2b = params["w2a"], params["w2b"]                # (Cout, Cs , 1, 2)
    c_out = w1a.shape[0]
    c_sp = w2a.shape[1]
    n = adj_hat.shape[0]
    eye = jnp.eye(n, dtype=jnp.float32)

    def tap_bd(wa, wb, k):
        # rows = (node, in_ch);  cols = [lin | gate] x (node, out_ch)
        a = jnp.einsum("nm,ci->nimc", eye, wa[:, :, 0, k])
        b = jnp.einsum("nm,ci->nimc", eye, wb[:, :, 0, k])
        cink = wa.shape[1]
        a = a.reshape(n * cink, n * c_out)
        b = b.reshape(n * cink, n * c_out)
        return jnp.concatenate([a, b], axis=1).astype(jnp.bfloat16)

    def tile_bias(ba, bb):
        return jnp.concatenate([jnp.tile(ba, n), jnp.tile(bb, n)]
                               ).reshape(1, 2 * n * c_out).astype(jnp.float32)

    # adj ⊗ w_sp : [(j, co), (i, cs)] = adj[i, j] * w_sp[co, cs]
    w_fold = jnp.einsum("ij,cs->jcis", adj_hat, params["w_sp"]
                        ).reshape(n * c_out, n * c_sp).astype(jnp.bfloat16)

    # BN within-node reduce + broadcast: [(n,a),(m,b)] = (n == m)
    bn_red = jnp.einsum("nm,ab->namb", eye,
                        jnp.ones((c_out, c_out), jnp.float32)
                        ).reshape(n * c_out, n * c_out)

    return {
        "w1t0": tap_bd(w1a, w1b, 0), "w1t1": tap_bd(w1a, w1b, 1),
        "b1": tile_bias(params["b1a"], params["b1b"]),
        "w_fold": w_fold,
        "w2t0": tap_bd(w2a, w2b, 0), "w2t1": tap_bd(w2a, w2b, 1),
        "b2": tile_bias(params["b2a"], params["b2b"]),
        "bn_red": bn_red,
        "gamma": jnp.repeat(params["gamma"], c_out).reshape(1, n * c_out)
                    .astype(jnp.float32),
        "beta": jnp.repeat(params["beta"], c_out).reshape(1, n * c_out)
                    .astype(jnp.float32),
    }


# ----------------------------------------------------------------------------
# Forward pass: one pallas_call; wrapper does only free layout plumbing
# ----------------------------------------------------------------------------
def stgcn_block_forward(x, prepped):
    bsz, n_nodes, t_in, c_in = x.shape
    c_sp = prepped["w2t0"].shape[0] // n_nodes
    c_out = prepped["w2t0"].shape[1] // (2 * n_nodes)
    t2 = t_in - 2

    # rows = (b, t), lanes = (node, cin); bf16 operands halve input DMA bytes.
    xt = jnp.transpose(x, (0, 2, 1, 3)).reshape(bsz, t_in, n_nodes * c_in)
    xt = xt.astype(jnp.bfloat16)

    kernel = partial(_stgcn_block_kernel, bsz=bsz, n_nodes=n_nodes,
                     t_in=t_in, c_in=c_in, c_sp=c_sp, c_out=c_out)
    out = pl.pallas_call(
        kernel,
        out_shape=jax.ShapeDtypeStruct((bsz * t2, n_nodes * c_out), jnp.float32),
        in_specs=[_VMEM] * 11,
        out_specs=_VMEM,
    )(xt, prepped["w1t0"], prepped["w1t1"], prepped["b1"], prepped["w_fold"],
      prepped["w2t0"], prepped["w2t1"], prepped["b2"], prepped["bn_red"],
      prepped["gamma"], prepped["beta"])

    # lane-dense (B*T2, N*Cout) -> (B, N, T2, Cout)
    return jnp.transpose(out.reshape(bsz, t2, n_nodes, c_out), (0, 2, 1, 3))


# ----------------------------------------------------------------------------
# Pure-JAX reference (mirrors the PyTorch module exactly)
# ----------------------------------------------------------------------------
def _reference(x, adj_hat, p):
    def tlayer(x, w_a, b_a, w_b, b_b):
        xc = jnp.transpose(x, (0, 3, 1, 2))  # NCHW
        dn = ("NCHW", "OIHW", "NCHW")
        normal = jax.lax.conv_general_dilated(
            xc, w_a, (1, 1), "VALID", dimension_numbers=dn,
            precision=jax.lax.Precision.HIGHEST) + b_a[None, :, None, None]
        sig = jax.nn.sigmoid(jax.lax.conv_general_dilated(
            xc, w_b, (1, 1), "VALID", dimension_numbers=dn,
            precision=jax.lax.Precision.HIGHEST) + b_b[None, :, None, None])
        return jnp.transpose(normal * sig, (0, 2, 3, 1))

    tb1 = tlayer(x, p["w1a"], p["b1a"], p["w1b"], p["b1b"])
    tpm = jnp.transpose(tb1, (1, 0, 2, 3))
    gconv1 = jnp.einsum("ij,jklm->kilm", adj_hat, tpm,
                        precision=jax.lax.Precision.HIGHEST)
    gconv2 = jax.nn.relu(jnp.matmul(gconv1, p["w_sp"],
                                    precision=jax.lax.Precision.HIGHEST))
    tb2 = tlayer(gconv2, p["w2a"], p["b2a"], p["w2b"], p["b2b"])
    mean = jnp.mean(tb2, axis=(0, 2, 3), keepdims=True)
    var = jnp.var(tb2, axis=(0, 2, 3), keepdims=True)
    gamma = p["gamma"].reshape(1, -1, 1, 1)
    beta = p["beta"].reshape(1, -1, 1, 1)
    return gamma * (tb2 - mean) / jnp.sqrt(var + 1e-5) + beta


# ----------------------------------------------------------------------------
# main
# ----------------------------------------------------------------------------
if __name__ == "__main__":
    B, N, T = 2, 16, 8
    in_ch, sp_ch, out_ch = 4, 8, 16

    key = jax.random.PRNGKey(0)
    ks = jax.random.split(key, 12)

    def u(k, shape, bound):
        return jax.random.uniform(k, shape, jnp.float32, -bound, bound)

    bnd1 = 1.0 / math.sqrt(in_ch * 1 * 2)        # conv fan-in
    bnd2 = 1.0 / math.sqrt(sp_ch * 1 * 2)
    bnd_sp = 1.0 / math.sqrt(sp_ch)              # initialise_weight()

    params = {
        "w1a": u(ks[0], (out_ch, in_ch, 1, 2), bnd1),
        "b1a": u(ks[1], (out_ch,), bnd1),
        "w1b": u(ks[2], (out_ch, in_ch, 1, 2), bnd1),
        "b1b": u(ks[3], (out_ch,), bnd1),
        "w_sp": u(ks[4], (out_ch, sp_ch), bnd_sp),
        "w2a": u(ks[5], (out_ch, sp_ch, 1, 2), bnd2),
        "b2a": u(ks[6], (out_ch,), bnd2),
        "w2b": u(ks[7], (out_ch, sp_ch, 1, 2), bnd2),
        "b2b": u(ks[8], (out_ch,), bnd2),
        "gamma": jnp.ones((N,), jnp.float32),
        "beta": jnp.zeros((N,), jnp.float32),
    }

    x = jax.random.normal(ks[9], (B, N, T, in_ch), jnp.float32)
    adj_raw = jax.random.uniform(ks[10], (N, N), jnp.float32)
    adj_hat = adj_raw / jnp.sum(adj_raw, axis=1, keepdims=True)  # row-normalized

    prepped = prepare_params(params, adj_hat)    # one-time, outside jit
    fwd = jax.jit(stgcn_block_forward)
    out = jax.block_until_ready(fwd(x, prepped))

    ref = jax.block_until_ready(_reference(x, adj_hat, params))
    assert out.shape == (B, N, T - 2, out_ch), out.shape
    assert jnp.allclose(out, ref, atol=2e-2, rtol=2e-2), (
        float(jnp.max(jnp.abs(out - ref))))

    print("KERNEL_OK")
</pallas_src>

<mosaic_0001>
module attributes {stable_mosaic.version = 11 : i64} {
  func.func @_stgcn_block_kernel(%arg0: memref<2x8x64xbf16, #tpu.memory_space<vmem>>, %arg1: memref<64x512xbf16, #tpu.memory_space<vmem>>, %arg2: memref<64x512xbf16, #tpu.memory_space<vmem>>, %arg3: memref<1x512xf32, #tpu.memory_space<vmem>>, %arg4: memref<256x128xbf16, #tpu.memory_space<vmem>>, %arg5: memref<128x512xbf16, #tpu.memory_space<vmem>>, %arg6: memref<128x512xbf16, #tpu.memory_space<vmem>>, %arg7: memref<1x512xf32, #tpu.memory_space<vmem>>, %arg8: memref<256x256xf32, #tpu.memory_space<vmem>>, %arg9: memref<1x256xf32, #tpu.memory_space<vmem>>, %arg10: memref<1x256xf32, #tpu.memory_space<vmem>>, %arg11: memref<12x256xf32, #tpu.memory_space<vmem>>) attributes {dimension_semantics = [], scalar_prefetch = 0 : i64, scratch_operands = 0 : i64, tpu.core_type = #tpu.core_type<tc>} {
    %c0 = arith.constant 0 : index
    %c0_0 = arith.constant 0 : index
    %c0_1 = arith.constant 0 : index
    %0 = vector.load %arg0[%c0, %c0_0, %c0_1] : memref<2x8x64xbf16, #tpu.memory_space<vmem>>, vector<2x8x64xbf16>
    %1 = vector.extract_strided_slice %0 {offsets = [0, 0, 0], sizes = [2, 7, 64], strides = [1, 1, 1]} : vector<2x8x64xbf16> to vector<2x7x64xbf16>
    %2 = vector.shape_cast %1 : vector<2x7x64xbf16> to vector<14x64xbf16>
    %3 = vector.extract_strided_slice %0 {offsets = [0, 1, 0], sizes = [2, 7, 64], strides = [1, 1, 1]} : vector<2x8x64xbf16> to vector<2x7x64xbf16>
    %4 = vector.shape_cast %3 : vector<2x7x64xbf16> to vector<14x64xbf16>
    %c0_2 = arith.constant 0 : index
    %c0_3 = arith.constant 0 : index
    %5 = vector.load %arg1[%c0_2, %c0_3] : memref<64x512xbf16, #tpu.memory_space<vmem>>, vector<64x512xbf16>
    %cst = arith.constant dense<0.000000e+00> : vector<14x512xf32>
    %6 = tpu.matmul %2, %5, %cst {dimension_numbers = #tpu.dot_dimension_numbers<[1], [0], [0], [1], [0, 0, 1, 1], [], []>} : vector<14x64xbf16>, vector<64x512xbf16>, vector<14x512xf32> -> vector<14x512xf32>
    %c0_4 = arith.constant 0 : index
    %c0_5 = arith.constant 0 : index
    %7 = vector.load %arg2[%c0_4, %c0_5] : memref<64x512xbf16, #tpu.memory_space<vmem>>, vector<64x512xbf16>
    %cst_6 = arith.constant dense<0.000000e+00> : vector<14x512xf32>
    %8 = tpu.matmul %4, %7, %cst_6 {dimension_numbers = #tpu.dot_dimension_numbers<[1], [0], [0], [1], [0, 0, 1, 1], [], []>} : vector<14x64xbf16>, vector<64x512xbf16>, vector<14x512xf32> -> vector<14x512xf32>
    %9 = arith.addf %6, %8 : vector<14x512xf32>
    %c0_7 = arith.constant 0 : index
    %c0_8 = arith.constant 0 : index
    %10 = vector.load %arg3[%c0_7, %c0_8] : memref<1x512xf32, #tpu.memory_space<vmem>>, vector<1x512xf32>
    %11 = vector.broadcast %10 : vector<1x512xf32> to vector<14x512xf32>
    %12 = arith.addf %9, %11 : vector<14x512xf32>
    %13 = vector.extract_strided_slice %12 {offsets = [0, 0], sizes = [14, 256], strides = [1, 1]} : vector<14x512xf32> to vector<14x256xf32>
    %14 = vector.extract_strided_slice %12 {offsets = [0, 256], sizes = [14, 256], strides = [1, 1]} : vector<14x512xf32> to vector<14x256xf32>
    %cst_9 = arith.constant 5.000000e-01 : f32
    %15 = vector.broadcast %cst_9 : f32 to vector<14x256xf32>
    %16 = arith.mulf %15, %14 : vector<14x256xf32>
    %17 = math.tanh %16 : vector<14x256xf32>
    %cst_10 = arith.constant 5.000000e-01 : f32
    %18 = vector.broadcast %cst_10 : f32 to vector<14x256xf32>
    %19 = arith.mulf %18, %17 : vector<14x256xf32>
    %cst_11 = arith.constant 5.000000e-01 : f32
    %20 = vector.broadcast %cst_11 : f32 to vector<14x256xf32>
    %21 = arith.addf %19, %20 : vector<14x256xf32>
    %22 = arith.mulf %13, %21 : vector<14x256xf32>
    %23 = arith.truncf %22 : vector<14x256xf32> to vector<14x256xbf16>
    %c0_12 = arith.constant 0 : index
    %c0_13 = arith.constant 0 : index
    %24 = vector.load %arg4[%c0_12, %c0_13] : memref<256x128xbf16, #tpu.memory_space<vmem>>, vector<256x128xbf16>
    %cst_14 = arith.constant dense<0.000000e+00> : vector<14x128xf32>
    %25 = tpu.matmul %23, %24, %cst_14 {dimension_numbers = #tpu.dot_dimension_numbers<[1], [0], [0], [1], [0, 0, 1, 1], [], []>} : vector<14x256xbf16>, vector<256x128xbf16>, vector<14x128xf32> -> vector<14x128xf32>
    %cst_15 = arith.constant 0.000000e+00 : f32
    %26 = vector.broadcast %cst_15 : f32 to vector<14x128xf32>
    %27 = arith.maximumf %25, %26 : vector<14x128xf32>
    %28 = arith.truncf %27 : vector<14x128xf32> to vector<14x128xbf16>
    %29 = vector.shape_cast %28 : vector<14x128xbf16> to vector<2x7x128xbf16>
    %30 = vector.extract_strided_slice %29 {offsets = [0, 0, 0], sizes = [2, 6, 128], strides = [1, 1, 1]} : vector<2x7x128xbf16> to vector<2x6x128xbf16>
    %31 = vector.shape_cast %30 : vector<2x6x128xbf16> to vector<12x128xbf16>
    %32 = vector.extract_strided_slice %29 {offsets = [0, 1, 0], sizes = [2, 6, 128], strides = [1, 1, 1]} : vector<2x7x128xbf16> to vector<2x6x128xbf16>
    %33 = vector.shape_cast %32 : vector<2x6x128xbf16> to vector<12x128xbf16>
    %c0_16 = arith.constant 0 : index
    %c0_17 = arith.constant 0 : index
    %34 = vector.load %arg5[%c0_16, %c0_17] : memref<128x512xbf16, #tpu.memory_space<vmem>>, vector<128x512xbf16>
    %cst_18 = arith.constant dense<0.000000e+00> : vector<12x512xf32>
    %35 = tpu.matmul %31, %34, %cst_18 {dimension_numbers = #tpu.dot_dimension_numbers<[1], [0], [0], [1], [0, 0, 1, 1], [], []>} : vector<12x128xbf16>, vector<128x512xbf16>, vector<12x512xf32> -> vector<12x512xf32>
    %c0_19 = arith.constant 0 : index
    %c0_20 = arith.constant 0 : index
    %36 = vector.load %arg6[%c0_19, %c0_20] : memref<128x512xbf16, #tpu.memory_space<vmem>>, vector<128x512xbf16>
    %cst_21 = arith.constant dense<0.000000e+00> : vector<12x512xf32>
    %37 = tpu.matmul %33, %36, %cst_21 {dimension_numbers = #tpu.dot_dimension_numbers<[1], [0], [0], [1], [0, 0, 1, 1], [], []>} : vector<12x128xbf16>, vector<128x512xbf16>, vector<12x512xf32> -> vector<12x512xf32>
    %38 = arith.addf %35, %37 : vector<12x512xf32>
    %c0_22 = arith.constant 0 : index
    %c0_23 = arith.constant 0 : index
    %39 = vector.load %arg7[%c0_22, %c0_23] : memref<1x512xf32, #tpu.memory_space<vmem>>, vector<1x512xf32>
    %40 = vector.broadcast %39 : vector<1x512xf32> to vector<12x512xf32>
    %41 = arith.addf %38, %40 : vector<12x512xf32>
    %42 = vector.extract_strided_slice %41 {offsets = [0, 0], sizes = [12, 256], strides = [1, 1]} : vector<12x512xf32> to vector<12x256xf32>
    %43 = vector.extract_strided_slice %41 {offsets = [0, 256], sizes = [12, 256], strides = [1, 1]} : vector<12x512xf32> to vector<12x256xf32>
    %cst_24 = arith.constant 5.000000e-01 : f32
    %44 = vector.broadcast %cst_24 : f32 to vector<12x256xf32>
    %45 = arith.mulf %44, %43 : vector<12x256xf32>
    %46 = math.tanh %45 : vector<12x256xf32>
    %cst_25 = arith.constant 5.000000e-01 : f32
    %47 = vector.broadcast %cst_25 : f32 to vector<12x256xf32>
    %48 = arith.mulf %47, %46 : vector<12x256xf32>
    %cst_26 = arith.constant 5.000000e-01 : f32
    %49 = vector.broadcast %cst_26 : f32 to vector<12x256xf32>
    %50 = arith.addf %48, %49 : vector<12x256xf32>
    %51 = arith.mulf %42, %50 : vector<12x256xf32>
    %cst_27 = arith.constant dense<0.000000e+00> : vector<256xf32>
    %52 = vector.multi_reduction <add>, %51, %cst_27 [0] : vector<12x256xf32> to vector<256xf32>
    %53 = vector.shape_cast %52 : vector<256xf32> to vector<1x256xf32>
    %54 = arith.mulf %51, %51 : vector<12x256xf32>
    %cst_28 = arith.constant dense<0.000000e+00> : vector<256xf32>
    %55 = vector.multi_reduction <add>, %54, %cst_28 [0] : vector<12x256xf32> to vector<256xf32>
    %56 = vector.shape_cast %55 : vector<256xf32> to vector<1x256xf32>
    %57 = tpu.concatenate %53, %56 in 0 : vector<1x256xf32>, vector<1x256xf32> -> vector<2x256xf32>
    %c0_29 = arith.constant 0 : index
    %c0_30 = arith.constant 0 : index
    %58 = vector.load %arg8[%c0_29, %c0_30] : memref<256x256xf32, #tpu.memory_space<vmem>>, vector<256x256xf32>
    %cst_31 = arith.constant dense<0.000000e+00> : vector<2x256xf32>
    %59 = tpu.matmul %57, %58, %cst_31 {dimension_numbers = #tpu.dot_dimension_numbers<[1], [0], [0], [1], [0, 0, 1, 1], [], []>} : vector<2x256xf32>, vector<256x256xf32>, vector<2x256xf32> -> vector<2x256xf32>
    %cst_32 = arith.constant 1.920000e+02 : f32
    %60 = vector.broadcast %cst_32 : f32 to vector<2x256xf32>
    %61 = arith.divf %59, %60 : vector<2x256xf32>
    %62 = vector.extract_strided_slice %61 {offsets = [0, 0], sizes = [1, 256], strides = [1, 1]} : vector<2x256xf32> to vector<1x256xf32>
    %63 = vector.extract_strided_slice %61 {offsets = [1, 0], sizes = [1, 256], strides = [1, 1]} : vector<2x256xf32> to vector<1x256xf32>
    %64 = arith.mulf %62, %62 : vector<1x256xf32>
    %65 = arith.subf %63, %64 : vector<1x256xf32>
    %cst_33 = arith.constant 0.000000e+00 : f32
    %66 = vector.broadcast %cst_33 : f32 to vector<1x256xf32>
    %67 = arith.maximumf %65, %66 : vector<1x256xf32>
    %c0_34 = arith.constant 0 : index
    %c0_35 = arith.constant 0 : index
    %68 = vector.load %arg9[%c0_34, %c0_35] : memref<1x256xf32, #tpu.memory_space<vmem>>, vector<1x256xf32>
    %cst_36 = arith.constant 9.99999974E-6 : f32
    %69 = vector.broadcast %cst_36 : f32 to vector<1x256xf32>
    %70 = arith.addf %67, %69 : vector<1x256xf32>
    %71 = math.rsqrt %70 : vector<1x256xf32>
    %72 = arith.mulf %68, %71 : vector<1x256xf32>
    %73 = vector.broadcast %62 : vector<1x256xf32> to vector<12x256xf32>
    %74 = arith.subf %51, %73 : vector<12x256xf32>
    %75 = vector.broadcast %72 : vector<1x256xf32> to vector<12x256xf32>
    %76 = arith.mulf %74, %75 : vector<12x256xf32>
    %c0_37 = arith.constant 0 : index
    %c0_38 = arith.constant 0 : index
    %77 = vector.load %arg10[%c0_37, %c0_38] : memref<1x256xf32, #tpu.memory_space<vmem>>, vector<1x256xf32>
    %78 = vector.broadcast %77 : vector<1x256xf32> to vector<12x256xf32>
    %79 = arith.addf %76, %78 : vector<12x256xf32>
    %c0_39 = arith.constant 0 : index
    %c0_40 = arith.constant 0 : index
    %80 = vector.load %arg11[%c0_39, %c0_40] : memref<12x256xf32, #tpu.memory_space<vmem>>, vector<12x256xf32>
    tpu.vector_store %arg11[%c0_39, %c0_40], %79 {strides = array<i32>} : memref<12x256xf32, #tpu.memory_space<vmem>>, vector<12x256xf32>,
    return
  }
}

</mosaic_0001>

<llo_original>
// kernel: stgcn_block_forward.1
$region0: #{stgcn_block_forward.1}
  #allocation0 [shape = 'u32[]', space=smem, size = 0x4, offset = 0x4, fixed_abs, tag = 'smem constant byte address 0x4 - core index']
  #allocation1 [shape = 'u32[72,128]{1,0:T(1,128)}', space=vmem, size = 0x9000, scoped, tag = 'internal scratch']
  %s0 = inlined_call_operand.vmem [shape: bf16[2,8,64], index: 0, kind: input, shape index: {}]
  %s1 = inlined_call_operand.hbm [shape: bf16[64,512], index: 1, kind: input, shape index: {}]
  %s2 = inlined_call_operand.hbm [shape: bf16[64,512], index: 2, kind: input, shape index: {}]
  %s3 = inlined_call_operand.vmem [shape: f32[1,512], index: 3, kind: input, shape index: {}]
  %s4 = inlined_call_operand.hbm [shape: bf16[256,128], index: 4, kind: input, shape index: {}]
  %s5 = inlined_call_operand.vmem [shape: bf16[128,512], index: 5, kind: input, shape index: {}]
  %s6 = inlined_call_operand.hbm [shape: bf16[128,512], index: 6, kind: input, shape index: {}]
  %s7 = inlined_call_operand.vmem [shape: f32[1,512], index: 7, kind: input, shape index: {}]
  %s8 = inlined_call_operand.hbm [shape: f32[256,256], index: 8, kind: input, shape index: {}]
  %s9 = inlined_call_operand.vmem [shape: f32[1,256], index: 9, kind: input, shape index: {}]
  %s10 = inlined_call_operand.vmem [shape: f32[1,256], index: 10, kind: input, shape index: {}]
  %s11 = inlined_call_operand.vmem [shape: f32[12,256], index: 11, kind: output, shape index: {}]
  %s12 = sld [smem:[#allocation0]]
  $region74: #{stgcn_block_forward.1} parent=0
    _
  %s14 = ssub.s32 1, %s12
  %s15 = scalar_select 0, %s14, %s12
  $region1: #{stgcn_block_forward.1} parent=0
    #allocation2 [shape = 'u8[65536]{0}', space=vmem, size = 0x10000, scoped, tag = 'input window, operand 1, single buffered']
    #allocation3 [shape = 's32[1]{0}', space=sflag, size = 0x4, scoped, tag = 'scoped memory for stgcn_block_forward.1']
    #allocation4 [shape = 'u8[65536]{0}', space=vmem, size = 0x10000, scoped, tag = 'input window, operand 2, single buffered']
    #allocation5 [shape = 's32[1]{0}', space=sflag, size = 0x4, scoped, tag = 'scoped memory for stgcn_block_forward.1']
    #allocation6 [shape = 'u8[65536]{0}', space=vmem, size = 0x10000, scoped, tag = 'input window, operand 4, single buffered']
    #allocation7 [shape = 'u8[131072]{0}', space=vmem, size = 0x20000, scoped, tag = 'input window, operand 6, single buffered']
    #allocation8 [shape = 's32[1]{0}', space=sflag, size = 0x4, scoped, tag = 'scoped memory for stgcn_block_forward.1']
    #allocation9 [shape = 'u8[262144]{0}', space=vmem, size = 0x40000, scoped, tag = 'input window, operand 8, single buffered']
    %16 = vsyncpa [#allocation3], 0
    %17 = vsyncpa [#allocation5], 0
    %18 = vsyncpa [#allocation8], 0
    // Predicated region
    $region2: #{stgcn_block_forward.1} parent=1 // pred_check
      _
    $region3: #{stgcn_block_forward.1} parent=1 // pred_check_branch
      %20 = sbr.rel (0) target = $region5
    $region4: #{stgcn_block_forward.1} parent=1 // pred_region
      _
    $region5: #{stgcn_block_forward.1} parent=1 // pred_fallthru
      _
    // Predicated region
    $region6: #{stgcn_block_forward.1} parent=1 // pred_check
      _
    $region7: #{stgcn_block_forward.1} parent=1 // pred_check_branch
      %22 = sbr.rel (0) target = $region9
    $region8: #{stgcn_block_forward.1} parent=1 // pred_region
      %24 = vsyncadd [#allocation3], 0
      %s25 = sshll.u32 %s1, 4
      %s26 = int_to_ptr.hbm [resolvable:$true] %s25
      %s27 = sshll.u32 [#allocation2], 4
      %s28 = int_to_ptr.vmem [resolvable:$true] %s27
      %33 = dma.hbm_to_vmem [thread:$0]  %s26, 2048, %s28, [#allocation3], 256, 256, 16
    $region9: #{stgcn_block_forward.1} parent=1 // pred_fallthru
      _
    // Predicated region
    $region10: #{stgcn_block_forward.1} parent=1 // pred_check
      _
    $region11: #{stgcn_block_forward.1} parent=1 // pred_check_branch
      %35 = sbr.rel (0) target = $region13
    $region12: #{stgcn_block_forward.1} parent=1 // pred_region
      %37 = vsyncadd [#allocation5], 0
      %s38 = sshll.u32 %s2, 4
      %s39 = int_to_ptr.hbm [resolvable:$true] %s38
      %s40 = sshll.u32 [#allocation4], 4
      %s41 = int_to_ptr.vmem [resolvable:$true] %s40
      %46 = dma.hbm_to_vmem [thread:$0]  %s39, 2048, %s41, [#allocation5], 256, 256, 16
    $region13: #{stgcn_block_forward.1} parent=1 // pred_fallthru
      _
    // Predicated region
    $region14: #{stgcn_block_forward.1} parent=1 // pred_check
      _
    $region15: #{stgcn_block_forward.1} parent=1 // pred_check_branch
      %48 = sbr.rel (0) target = $region17
    $region16: #{stgcn_block_forward.1} parent=1 // pred_region
      _
    $region17: #{stgcn_block_forward.1} parent=1 // pred_fallthru
      _
    // Predicated region
    $region18: #{stgcn_block_forward.1} parent=1 // pred_check
      _
    $region19: #{stgcn_block_forward.1} parent=1 // pred_check_branch
      %50 = sbr.rel (0) target = $region21
    $region20: #{stgcn_block_forward.1} parent=1 // pred_region
      %52 = vsyncadd [#allocation5], 0
      %s53 = sshll.u32 %s4, 4
      %s54 = int_to_ptr.hbm [resolvable:$true] %s53
      %s55 = sshll.u32 [#allocation6], 4
      %s56 = int_to_ptr.vmem [resolvable:$true] %s55
      %61 = dma.hbm_to_vmem [thread:$0]  %s54, 2048, %s56, [#allocation5], 64, 64, 4
    $region21: #{stgcn_block_forward.1} parent=1 // pred_fallthru
      _
    // Predicated region
    $region22: #{stgcn_block_forward.1} parent=1 // pred_check
      _
    $region23: #{stgcn_block_forward.1} parent=1 // pred_check_branch
      %63 = sbr.rel (0) target = $region25
    $region24: #{stgcn_block_forward.1} parent=1 // pred_region
      _
    $region25: #{stgcn_block_forward.1} parent=1 // pred_fallthru
      _
    // Predicated region
    $region26: #{stgcn_block_forward.1} parent=1 // pred_check
      _
    $region27: #{stgcn_block_forward.1} parent=1 // pred_check_branch
      %65 = sbr.rel (0) target = $region29
    $region28: #{stgcn_block_forward.1} parent=1 // pred_region
      %67 = vsyncadd [#allocation8], 0
      %s68 = sshll.u32 %s6, 4
      %s69 = int_to_ptr.hbm [resolvable:$true] %s68
      %s70 = sshll.u32 [#allocation7], 4
      %s71 = int_to_ptr.vmem [resolvable:$true] %s70
      %76 = dma.hbm_to_vmem [thread:$0]  %s69, 4096, %s71, [#allocation8], 256, 256, 16
    $region29: #{stgcn_block_forward.1} parent=1 // pred_fallthru
      _
    // Predicated region
    $region30: #{stgcn_block_forward.1} parent=1 // pred_check
      _
    $region31: #{stgcn_block_forward.1} parent=1 // pred_check_branch
      %78 = sbr.rel (0) target = $region33
    $region32: #{stgcn_block_forward.1} parent=1 // pred_region
      _
    $region33: #{stgcn_block_forward.1} parent=1 // pred_fallthru
      _
    // Predicated region
    $region34: #{stgcn_block_forward.1} parent=1 // pred_check
      _
    $region35: #{stgcn_block_forward.1} parent=1 // pred_check_branch
      %80 = sbr.rel (0) target = $region37
    $region36: #{stgcn_block_forward.1} parent=1 // pred_region
      %82 = vsyncadd [#allocation8], 0
      %s83 = sshll.u32 %s8, 4
      %s84 = int_to_ptr.hbm [resolvable:$true] %s83
      %s85 = sshll.u32 [#allocation9], 4
      %s86 = int_to_ptr.vmem [resolvable:$true] %s85
      %91 = dma.hbm_to_vmem [thread:$0]  %s84, 8192, %s86, [#allocation8], 256, 256, 16
    $region37: #{stgcn_block_forward.1} parent=1 // pred_fallthru
      _
    // Predicated region
    $region38: #{stgcn_block_forward.1} parent=1 // pred_check
      _
    $region39: #{stgcn_block_forward.1} parent=1 // pred_check_branch
      %93 = sbr.rel (0) target = $region41
    $region40: #{stgcn_block_forward.1} parent=1 // pred_region
      _
    $region41: #{stgcn_block_forward.1} parent=1 // pred_fallthru
      _
    // Predicated region
    $region42: #{stgcn_block_forward.1} parent=1 // pred_check
      _
    $region43: #{stgcn_block_forward.1} parent=1 // pred_check_branch
      %95 = sbr.rel (0) target = $region45
    $region44: #{stgcn_block_forward.1} parent=1 // pred_region
      _
    $region45: #{stgcn_block_forward.1} parent=1 // pred_fallthru
      _
    // Predicated region
    $region46: #{stgcn_block_forward.1} parent=1 // pred_check
      _
    $region47: #{stgcn_block_forward.1} parent=1 // pred_check_branch
      %97 = sbr.rel (0) target = $region49
    $region48: #{stgcn_block_forward.1} parent=1 // pred_region
      %99 = dma.done [#allocation3], 2048
    $region49: #{stgcn_block_forward.1} parent=1 // pred_fallthru
      _
    // Predicated region
    $region50: #{stgcn_block_forward.1} parent=1 // pred_check
      _
    $region51: #{stgcn_block_forward.1} parent=1 // pred_check_branch
      %101 = sbr.rel (0) target = $region53
    $region52: #{stgcn_block_forward.1} parent=1 // pred_region
      %103 = dma.done [#allocation5], 2048
    $region53: #{stgcn_block_forward.1} parent=1 // pred_fallthru
      _
    // Predicated region
    $region54: #{stgcn_block_forward.1} parent=1 // pred_check
      _
    $region55: #{stgcn_block_forward.1} parent=1 // pred_check_branch
      %105 = sbr.rel (0) target = $region57
    $region56: #{stgcn_block_forward.1} parent=1 // pred_region
      %107 = dma.done [#allocation5], 2048
    $region57: #{stgcn_block_forward.1} parent=1 // pred_fallthru
      _
    // Predicated region
    $region58: #{stgcn_block_forward.1} parent=1 // pred_check
      _
    $region59: #{stgcn_block_forward.1} parent=1 // pred_check_branch
      %109 = sbr.rel (0) target = $region61
    $region60: #{stgcn_block_forward.1} parent=1 // pred_region
      %111 = dma.done [#allocation8], 4096
    $region61: #{stgcn_block_forward.1} parent=1 // pred_fallthru
      _
    // Predicated region
    $region62: #{stgcn_block_forward.1} parent=1 // pred_check
      _
    $region63: #{stgcn_block_forward.1} parent=1 // pred_check_branch
      %113 = sbr.rel (0) target = $region65
    $region64: #{stgcn_block_forward.1} parent=1 // pred_region
      %115 = dma.done [#allocation8], 8192
    $region65: #{stgcn_block_forward.1} parent=1 // pred_fallthru
      _
    %v117 = vld [vmem:[%s0] sm:$0xf]
    %v118 = vld [vmem:[%s0 + $0x4] sm:$0xf]
    %v121 = vrot.slane %v117, 3
    %v122 = vrot.slane %v118, 3
    %vm123 = vcmask 1040384
    %v126 = vsel %vm123, %v117, %v121
    %vm128 = vcmask 1041409
    %v129 = vsel %vm128, %v117, %v121
    %v131 = vrot.slane %v129, 1
    %vm132 = vcmask 1042434
    %v133 = vsel %vm132, %v117, %v121
    %v135 = vrot.slane %v133, 2
    %vm136 = vcmask 1043459
    %v137 = vsel %vm136, %v117, %v121
    %v139 = vrot.slane %v137, 3
    %v142 = vsel %vm123, %v118, %v122
    %v144 = vsel %vm128, %v118, %v122
    %v146 = vrot.slane %v144, 1
    %v147 = vsel %vm132, %v118, %v122
    %v149 = vrot.slane %v147, 2
    %v150 = vsel %vm136, %v118, %v122
    %v152 = vrot.slane %v150, 3
    %v153 = vunpack.i.l.s16 %v126
    %v154 = vunpack.i.h.s16 %v126
    %v155 = vunpack.i.l.s16 %v131
    %v156 = vunpack.i.h.s16 %v131
    %v157 = vunpack.i.l.s16 %v135
    %v158 = vunpack.i.h.s16 %v135
    %v159 = vunpack.i.l.s16 %v139
    %v160 = vunpack.i.l.s16 %v142
    %v161 = vunpack.i.h.s16 %v142
    %v162 = vunpack.i.l.s16 %v146
    %v163 = vunpack.i.h.s16 %v146
    %v164 = vunpack.i.l.s16 %v149
    %v165 = vunpack.i.h.s16 %v149
    %v166 = vunpack.i.l.s16 %v152
    %v167 = vunpack.i.h.s16 %v139
    %v168 = vunpack.i.h.s16 %v152
    %v169 = vld [vmem:[#allocation2] sm:$0xff]
    %v170 = vld [vmem:[#allocation2 + $0x8] sm:$0xff]
    %v171 = vld [vmem:[#allocation2 + $0x10] sm:$0xff]
    %v172 = vld [vmem:[#allocation2 + $0x18] sm:$0xff]
    %v173 = vld [vmem:[#allocation2 + $0x20] sm:$0xff]
    %v174 = vld [vmem:[#allocation2 + $0x28] sm:$0xff]
    %v175 = vld [vmem:[#allocation2 + $0x30] sm:$0xff]
    %v176 = vld [vmem:[#allocation2 + $0x38] sm:$0xff]
    %v177 = vld [vmem:[#allocation2 + $0x40] sm:$0xff]
    %v178 = vld [vmem:[#allocation2 + $0x48] sm:$0xff]
    %v179 = vld [vmem:[#allocation2 + $0x50] sm:$0xff]
    %v180 = vld [vmem:[#allocation2 + $0x58] sm:$0xff]
    %v181 = vld [vmem:[#allocation2 + $0x60] sm:$0xff]
    %v182 = vld [vmem:[#allocation2 + $0x68] sm:$0xff]
    %v183 = vld [vmem:[#allocation2 + $0x70] sm:$0xff]
    %v184 = vld [vmem:[#allocation2 + $0x78] sm:$0xff]
    %v185 = vld [vmem:[#allocation4] sm:$0xff]
    %v186 = vld [vmem:[#allocation4 + $0x8] sm:$0xff]
    %v187 = vld [vmem:[#allocation4 + $0x10] sm:$0xff]
    %v188 = vld [vmem:[#allocation4 + $0x18] sm:$0xff]
    %v189 = vld [vmem:[#allocation4 + $0x20] sm:$0xff]
    %v190 = vld [vmem:[#allocation4 + $0x28] sm:$0xff]
    %v191 = vld [vmem:[#allocation4 + $0x30] sm:$0xff]
    %v192 = vld [vmem:[#allocation4 + $0x38] sm:$0xff]
    %v193 = vld [vmem:[#allocation4 + $0x40] sm:$0xff]
    %v194 = vld [vmem:[#allocation4 + $0x48] sm:$0xff]
    %v195 = vld [vmem:[#allocation4 + $0x50] sm:$0xff]
    %v196 = vld [vmem:[#allocation4 + $0x58] sm:$0xff]
    %v197 = vld [vmem:[#allocation4 + $0x60] sm:$0xff]
    %v198 = vld [vmem:[#allocation4 + $0x68] sm:$0xff]
    %v199 = vld [vmem:[#allocation4 + $0x70] sm:$0xff]
    %v200 = vld [vmem:[#allocation4 + $0x78] sm:$0xff]
    %v201 = vpack.i.b16 %v155, %v154
    %v202 = vpack.i.b16 %v157, %v156
    %v203 = vpack.i.b16 %v159, %v158
    %v204 = vpack.i.b16 %v161, %v167
    %v205 = vpack.i.b16 %v163, %v162
    %v206 = vpack.i.b16 %v165, %v164
    %v207 = vpack.i.b16 %v168, %v166
    %209 = vst [vmem:[#allocation1] ss:$9 sm:$0xff] %v201
    %s211 = scalar_lea.vmem [#allocation1], 1
    %212 = vst [vmem:[%s211] ss:$9 sm:$0xff] %v202
    %s214 = scalar_lea.vmem [#allocation1], 2
    %215 = vst [vmem:[%s214] ss:$9 sm:$0xff] %v203
    %s217 = scalar_lea.vmem [#allocation1], 3
    %218 = vst [vmem:[%s217] ss:$9 sm:$0xff] %v204
    %s220 = scalar_lea.vmem [#allocation1], 4
    %221 = vst [vmem:[%s220] ss:$9 sm:$0xff] %v205
    %s223 = scalar_lea.vmem [#allocation1], 5
    %224 = vst [vmem:[%s223] ss:$9 sm:$0xff] %v206
    %s226 = scalar_lea.vmem [#allocation1], 6
    %227 = vst [vmem:[%s226] ss:$9 sm:$0xff] %v207
    %v228 = vld [vmem:[#allocation1] sm:$0xff]
    %v245 = vunpack.c.l.b16 %v185
    %v246 = vunpack.c.h.b16 %v185
    %v247 = vunpack.c.l.b16 %v186
    %v248 = vunpack.c.h.b16 %v186
    %v249 = vunpack.c.l.b16 %v187
    %v250 = vunpack.c.h.b16 %v187
    %v251 = vunpack.c.l.b16 %v188
    %v252 = vunpack.c.h.b16 %v188
    %v253 = vunpack.c.l.b16 %v189
    %v254 = vunpack.c.h.b16 %v189
    %v255 = vunpack.c.l.b16 %v190
    %v256 = vunpack.c.h.b16 %v190
    %v257 = vunpack.c.l.b16 %v191
    %v258 = vunpack.c.h.b16 %v191
    %v259 = vunpack.c.l.b16 %v192
    %v260 = vunpack.c.h.b16 %v192
    %v261 = vunpack.c.l.b16 %v193
    %v262 = vunpack.c.h.b16 %v193
    %v263 = vunpack.c.l.b16 %v194
    %v264 = vunpack.c.h.b16 %v194
    %v265 = vunpack.c.l.b16 %v195
    %v266 = vunpack.c.h.b16 %v195
    %v267 = vunpack.c.l.b16 %v196
    %v268 = vunpack.c.h.b16 %v196
    %v269 = vunpack.c.l.b16 %v197
    %v270 = vunpack.c.h.b16 %v197
    %v271 = vunpack.c.l.b16 %v198
    %v272 = vunpack.c.h.b16 %v198
    %v273 = vunpack.c.l.b16 %v199
    %v274 = vunpack.c.h.b16 %v199
    %v275 = vunpack.c.l.b16 %v200
    %v276 = vunpack.c.h.b16 %v200
    %v277 = vpack.c.b16 %v249, %v245
    %v278 = vpack.c.b16 %v250, %v246
    %v279 = vpack.c.b16 %v251, %v247
    %v280 = vpack.c.b16 %v252, %v248
    %v281 = vpack.c.b16 %v257, %v253
    %v282 = vpack.c.b16 %v258, %v254
    %v283 = vpack.c.b16 %v259, %v255
    %v284 = vpack.c.b16 %v260, %v256
    %v285 = vpack.c.b16 %v265, %v261
    %v286 = vpack.c.b16 %v266, %v262
    %v287 = vpack.c.b16 %v267, %v263
    %v288 = vpack.c.b16 %v268, %v264
    %v289 = vpack.c.b16 %v273, %v269
    %v290 = vpack.c.b16 %v274, %v270
    %v291 = vpack.c.b16 %v275, %v271
    %v292 = vpack.c.b16 %v276, %v272
    %vm309 = vcmask 523264
    %v310 = vsel %vm309, %v228, 0
    %312 = vmatpush.bf16.msra.mxu0 0
    %313 = vmatpush.bf16.msra.mxu0 0
    %314 = vmatpush.bf16.msra.mxu0 0
    %315 = vmatpush.bf16.msra.mxu0 0
    %316 = vmatpush.bf16.msra.mxu0 %v289
    %317 = vmatpush.bf16.msra.mxu0 %v285
    %318 = vmatpush.bf16.msra.mxu0 %v281
    %319 = vmatpush.bf16.msra.mxu0 %v277
    %320 = vmatmul.bf16.gmra.mxu0 %v310
    %v321 = vpop.f32.mrf.mxu0
    %v322 = vadd.f32 0.0, %v321
    %v323 = vpop.f32.mrf.mxu0
    %v324 = vadd.f32 0.0, %v323
    %325 = vdwg.mxu0
    %326 = vmatpush.bf16.msra.mxu0 0
    %327 = vmatpush.bf16.msra.mxu0 0
    %328 = vmatpush.bf16.msra.mxu0 0
    %329 = vmatpush.bf16.msra.mxu0 0
    %330 = vmatpush.bf16.msra.mxu0 %v290
    %331 = vmatpush.bf16.msra.mxu0 %v286
    %332 = vmatpush.bf16.msra.mxu0 %v282
    %333 = vmatpush.bf16.msra.mxu0 %v278
    %334 = vmatmul.bf16.gmra.mxu0 %v310
    %v335 = vpop.f32.mrf.mxu0
    %v336 = vadd.f32 0.0, %v335
    %v337 = vpop.f32.mrf.mxu0
    %v338 = vadd.f32 0.0, %v337
    %339 = vdwg.mxu0
    %340 = vmatpush.bf16.msra.mxu0 0
    %341 = vmatpush.bf16.msra.mxu0 0
    %342 = vmatpush.bf16.msra.mxu0 0
    %343 = vmatpush.bf16.msra.mxu0 0
    %344 = vmatpush.bf16.msra.mxu0 %v291
    %345 = vmatpush.bf16.msra.mxu0 %v287
    %346 = vmatpush.bf16.msra.mxu0 %v283
    %347 = vmatpush.bf16.msra.mxu0 %v279
    %348 = vmatmul.bf16.gmra.mxu0 %v310
    %v349 = vpop.f32.mrf.mxu0
    %v350 = vadd.f32 0.0, %v349
    %v351 = vpop.f32.mrf.mxu0
    %v352 = vadd.f32 0.0, %v351
    %353 = vdwg.mxu0
    %354 = vmatpush.bf16.msra.mxu0 0
    %355 = vmatpush.bf16.msra.mxu0 0
    %356 = vmatpush.bf16.msra.mxu0 0
    %357 = vmatpush.bf16.msra.mxu0 0
    %358 = vmatpush.bf16.msra.mxu0 %v292
    %359 = vmatpush.bf16.msra.mxu0 %v288
    %360 = vmatpush.bf16.msra.mxu0 %v284
    %361 = vmatpush.bf16.msra.mxu0 %v280
    %362 = vmatmul.bf16.gmra.mxu0 %v310
    %v363 = vpop.f32.mrf.mxu0
    %v364 = vadd.f32 0.0, %v363
    %v365 = vpop.f32.mrf.mxu0
    %v366 = vadd.f32 0.0, %v365
    %367 = vdwg.mxu0
    %v368 = vpack.i.b16 %v154, %v153
    %v369 = vpack.i.b16 %v156, %v155
    %v370 = vpack.i.b16 %v158, %v157
    %v371 = vpack.i.b16 %v160, %v159
    %v372 = vpack.i.b16 %v162, %v161
    %v373 = vpack.i.b16 %v164, %v163
    %v374 = vpack.i.b16 %v166, %v165
    %376 = vst [vmem:[#allocation1] ss:$9 sm:$0xff] %v368
    %s378 = scalar_lea.vmem [#allocation1], 1
    %379 = vst [vmem:[%s378] ss:$9 sm:$0xff] %v369
    %s381 = scalar_lea.vmem [#allocation1], 2
    %382 = vst [vmem:[%s381] ss:$9 sm:$0xff] %v370
    %s384 = scalar_lea.vmem [#allocation1], 3
    %385 = vst [vmem:[%s384] ss:$9 sm:$0xff] %v371
    %s387 = scalar_lea.vmem [#allocation1], 4
    %388 = vst [vmem:[%s387] ss:$9 sm:$0xff] %v372
    %s390 = scalar_lea.vmem [#allocation1], 5
    %391 = vst [vmem:[%s390] ss:$9 sm:$0xff] %v373
    %s393 = scalar_lea.vmem [#allocation1], 6
    %394 = vst [vmem:[%s393] ss:$9 sm:$0xff] %v374
    %v395 = vld [vmem:[#allocation1] sm:$0xff]
    %v412 = vunpack.c.l.b16 %v169
    %v413 = vunpack.c.h.b16 %v169
    %v414 = vunpack.c.l.b16 %v170
    %v415 = vunpack.c.h.b16 %v170
    %v416 = vunpack.c.l.b16 %v171
    %v417 = vunpack.c.h.b16 %v171
    %v418 = vunpack.c.l.b16 %v172
    %v419 = vunpack.c.h.b16 %v172
    %v420 = vunpack.c.l.b16 %v173
    %v421 = vunpack.c.h.b16 %v173
    %v422 = vunpack.c.l.b16 %v174
    %v423 = vunpack.c.h.b16 %v174
    %v424 = vunpack.c.l.b16 %v175
    %v425 = vunpack.c.h.b16 %v175
    %v426 = vunpack.c.l.b16 %v176
    %v427 = vunpack.c.h.b16 %v176
    %v428 = vunpack.c.l.b16 %v177
    %v429 = vunpack.c.h.b16 %v177
    %v430 = vunpack.c.l.b16 %v178
    %v431 = vunpack.c.h.b16 %v178
    %v432 = vunpack.c.l.b16 %v179
    %v433 = vunpack.c.h.b16 %v179
    %v434 = vunpack.c.l.b16 %v180
    %v435 = vunpack.c.h.b16 %v180
    %v436 = vunpack.c.l.b16 %v181
    %v437 = vunpack.c.h.b16 %v181
    %v438 = vunpack.c.l.b16 %v182
    %v439 = vunpack.c.h.b16 %v182
    %v440 = vunpack.c.l.b16 %v183
    %v441 = vunpack.c.h.b16 %v183
    %v442 = vunpack.c.l.b16 %v184
    %v443 = vunpack.c.h.b16 %v184
    %v444 = vpack.c.b16 %v416, %v412
    %v445 = vpack.c.b16 %v417, %v413
    %v446 = vpack.c.b16 %v418, %v414
    %v447 = vpack.c.b16 %v419, %v415
    %v448 = vpack.c.b16 %v424, %v420
    %v449 = vpack.c.b16 %v425, %v421
    %v450 = vpack.c.b16 %v426, %v422
    %v451 = vpack.c.b16 %v427, %v423
    %v452 = vpack.c.b16 %v432, %v428
    %v453 = vpack.c.b16 %v433, %v429
    %v454 = vpack.c.b16 %v434, %v430
    %v455 = vpack.c.b16 %v435, %v431
    %v456 = vpack.c.b16 %v440, %v436
    %v457 = vpack.c.b16 %v441, %v437
    %v458 = vpack.c.b16 %v442, %v438
    %v459 = vpack.c.b16 %v443, %v439
    %v476 = vsel %vm309, %v395, 0
    %478 = vmatpush.bf16.msra.mxu0 0
    %479 = vmatpush.bf16.msra.mxu0 0
    %480 = vmatpush.bf16.msra.mxu0 0
    %481 = vmatpush.bf16.msra.mxu0 0
    %482 = vmatpush.bf16.msra.mxu0 %v456
    %483 = vmatpush.bf16.msra.mxu0 %v452
    %484 = vmatpush.bf16.msra.mxu0 %v448
    %485 = vmatpush.bf16.msra.mxu0 %v444
    %486 = vmatmul.bf16.gmra.mxu0 %v476
    %v487 = vpop.f32.mrf.mxu0
    %v488 = vadd.f32 %v322, %v487
    %v489 = vpop.f32.mrf.mxu0
    %v490 = vadd.f32 %v324, %v489
    %491 = vdwg.mxu0
    %492 = vmatpush.bf16.msra.mxu0 0
    %493 = vmatpush.bf16.msra.mxu0 0
    %494 = vmatpush.bf16.msra.mxu0 0
    %495 = vmatpush.bf16.msra.mxu0 0
    %496 = vmatpush.bf16.msra.mxu0 %v457
    %497 = vmatpush.bf16.msra.mxu0 %v453
    %498 = vmatpush.bf16.msra.mxu0 %v449
    %499 = vmatpush.bf16.msra.mxu0 %v445
    %500 = vmatmul.bf16.gmra.mxu0 %v476
    %v501 = vpop.f32.mrf.mxu0
    %v502 = vadd.f32 %v336, %v501
    %v503 = vpop.f32.mrf.mxu0
    %v504 = vadd.f32 %v338, %v503
    %505 = vdwg.mxu0
    %506 = vmatpush.bf16.msra.mxu0 0
    %507 = vmatpush.bf16.msra.mxu0 0
    %508 = vmatpush.bf16.msra.mxu0 0
    %509 = vmatpush.bf16.msra.mxu0 0
    %510 = vmatpush.bf16.msra.mxu0 %v458
    %511 = vmatpush.bf16.msra.mxu0 %v454
    %512 = vmatpush.bf16.msra.mxu0 %v450
    %513 = vmatpush.bf16.msra.mxu0 %v446
    %514 = vmatmul.bf16.gmra.mxu0 %v476
    %v515 = vpop.f32.mrf.mxu0
    %v516 = vadd.f32 %v350, %v515
    %v517 = vpop.f32.mrf.mxu0
    %v518 = vadd.f32 %v352, %v517
    %519 = vdwg.mxu0
    %520 = vmatpush.bf16.msra.mxu0 0
    %521 = vmatpush.bf16.msra.mxu0 0
    %522 = vmatpush.bf16.msra.mxu0 0
    %523 = vmatpush.bf16.msra.mxu0 0
    %524 = vmatpush.bf16.msra.mxu0 %v459
    %525 = vmatpush.bf16.msra.mxu0 %v455
    %526 = vmatpush.bf16.msra.mxu0 %v451
    %527 = vmatpush.bf16.msra.mxu0 %v447
    %528 = vmatmul.bf16.gmra.mxu0 %v476
    %v529 = vpop.f32.mrf.mxu0
    %v530 = vadd.f32 %v364, %v529
    %v531 = vpop.f32.mrf.mxu0
    %v532 = vadd.f32 %v366, %v531
    %533 = vdwg.mxu0
    %v534 = vld [vmem:[%s3] sm:$0xf]
    %v536 = vperm.slane %v534, 0
    %v537 = vperm.slane %v534, 1
    %v538 = vperm.slane %v534, 2
    %v539 = vperm.slane %v534, 3
    %v544 = vadd.f32 %v488, %v536
    %v545 = vadd.f32 %v502, %v537
    %v546 = vadd.f32 %v516, %v538
    %v547 = vadd.f32 %v530, %v539
    %v548 = vadd.f32 %v490, %v536
    %v549 = vadd.f32 %v504, %v537
    %v550 = vadd.f32 %v518, %v538
    %v551 = vadd.f32 %v532, %v539
    %v552 = vmul.f32 %v546, 0.5
    %v553 = vmul.f32 %v547, 0.5
    %v554 = vmul.f32 %v550, 0.5
    %v555 = vmul.f32 %v551, 0.5
    %v556 = vtanh.pop %v552
    %v557 = vtanh.pop %v553
    %v558 = vtanh.pop %v554
    %v559 = vtanh.pop %v555
    %v560 = vmul.f32 %v556, 0.5
    %v561 = vmul.f32 %v557, 0.5
    %v562 = vmul.f32 %v558, 0.5
    %v563 = vmul.f32 %v559, 0.5
    %v564 = vadd.f32 %v560, 0.5
    %v565 = vadd.f32 %v561, 0.5
    %v566 = vadd.f32 %v562, 0.5
    %v567 = vadd.f32 %v563, 0.5
    %v568 = vmul.f32 %v544, %v564
    %v569 = vmul.f32 %v545, %v565
    %v570 = vmul.f32 %v548, %v566
    %v571 = vmul.f32 %v549, %v567
    %v572 = vpack.c.bf16 %v570, %v568
    %v573 = vpack.c.bf16 %v571, %v569
    %v574 = vld [vmem:[#allocation6] sm:$0xf]
    %v575 = vld [vmem:[#allocation6 + $0x4] sm:$0xf]
    %v576 = vld [vmem:[#allocation6 + $0x8] sm:$0xf]
    %v577 = vld [vmem:[#allocation6 + $0xc] sm:$0xf]
    %v578 = vld [vmem:[#allocation6 + $0x10] sm:$0xf]
    %v579 = vld [vmem:[#allocation6 + $0x14] sm:$0xf]
    %v580 = vld [vmem:[#allocation6 + $0x18] sm:$0xf]
    %v581 = vld [vmem:[#allocation6 + $0x1c] sm:$0xf]
    %v582 = vld [vmem:[#allocation6 + $0x20] sm:$0xf]
    %v583 = vld [vmem:[#allocation6 + $0x24] sm:$0xf]
    %v584 = vld [vmem:[#allocation6 + $0x28] sm:$0xf]
    %v585 = vld [vmem:[#allocation6 + $0x2c] sm:$0xf]
    %v586 = vld [vmem:[#allocation6 + $0x30] sm:$0xf]
    %v587 = vld [vmem:[#allocation6 + $0x34] sm:$0xf]
    %v588 = vld [vmem:[#allocation6 + $0x38] sm:$0xf]
    %v589 = vld [vmem:[#allocation6 + $0x3c] sm:$0xf]
    %v590 = vld [vmem:[#allocation6 + $0x40] sm:$0xf]
    %v591 = vld [vmem:[#allocation6 + $0x44] sm:$0xf]
    %v592 = vld [vmem:[#allocation6 + $0x48] sm:$0xf]
    %v593 = vld [vmem:[#allocation6 + $0x4c] sm:$0xf]
    %v594 = vld [vmem:[#allocation6 + $0x50] sm:$0xf]
    %v595 = vld [vmem:[#allocation6 + $0x54] sm:$0xf]
    %v596 = vld [vmem:[#allocation6 + $0x58] sm:$0xf]
    %v597 = vld [vmem:[#allocation6 + $0x5c] sm:$0xf]
    %v598 = vld [vmem:[#allocation6 + $0x60] sm:$0xf]
    %v599 = vld [vmem:[#allocation6 + $0x64] sm:$0xf]
    %v600 = vld [vmem:[#allocation6 + $0x68] sm:$0xf]
    %v601 = vld [vmem:[#allocation6 + $0x6c] sm:$0xf]
    %v602 = vld [vmem:[#allocation6 + $0x70] sm:$0xf]
    %v603 = vld [vmem:[#allocation6 + $0x74] sm:$0xf]
    %v604 = vld [vmem:[#allocation6 + $0x78] sm:$0xf]
    %v605 = vld [vmem:[#allocation6 + $0x7c] sm:$0xf]
    %v638 = vunpack.c.l.b16 %v574
    %v639 = vunpack.c.l.b16 %v575
    %v640 = vunpack.c.l.b16 %v576
    %v641 = vunpack.c.l.b16 %v577
    %v642 = vunpack.c.l.b16 %v578
    %v643 = vunpack.c.l.b16 %v579
    %v644 = vunpack.c.l.b16 %v580
    %v645 = vunpack.c.l.b16 %v581
    %v646 = vunpack.c.l.b16 %v582
    %v647 = vunpack.c.l.b16 %v583
    %v648 = vunpack.c.l.b16 %v584
    %v649 = vunpack.c.l.b16 %v585
    %v650 = vunpack.c.l.b16 %v586
    %v651 = vunpack.c.l.b16 %v587
    %v652 = vunpack.c.l.b16 %v588
    %v653 = vunpack.c.l.b16 %v589
    %v654 = vunpack.c.l.b16 %v590
    %v655 = vunpack.c.l.b16 %v591
    %v656 = vunpack.c.l.b16 %v592
    %v657 = vunpack.c.l.b16 %v593
    %v658 = vunpack.c.l.b16 %v594
    %v659 = vunpack.c.l.b16 %v595
    %v660 = vunpack.c.l.b16 %v596
    %v661 = vunpack.c.l.b16 %v597
    %v662 = vunpack.c.l.b16 %v598
    %v663 = vunpack.c.l.b16 %v599
    %v664 = vunpack.c.l.b16 %v600
    %v665 = vunpack.c.l.b16 %v601
    %v666 = vunpack.c.l.b16 %v602
    %v667 = vunpack.c.l.b16 %v603
    %v668 = vunpack.c.l.b16 %v604
    %v669 = vunpack.c.l.b16 %v605
    %v670 = vpack.c.b16 %v639, %v638
    %v671 = vpack.c.b16 %v641, %v640
    %v672 = vpack.c.b16 %v643, %v642
    %v673 = vpack.c.b16 %v645, %v644
    %v674 = vpack.c.b16 %v647, %v646
    %v675 = vpack.c.b16 %v649, %v648
    %v676 = vpack.c.b16 %v651, %v650
    %v677 = vpack.c.b16 %v653, %v652
    %v678 = vpack.c.b16 %v655, %v654
    %v679 = vpack.c.b16 %v657, %v656
    %v680 = vpack.c.b16 %v659, %v658
    %v681 = vpack.c.b16 %v661, %v660
    %v682 = vpack.c.b16 %v663, %v662
    %v683 = vpack.c.b16 %v665, %v664
    %v684 = vpack.c.b16 %v667, %v666
    %v685 = vpack.c.b16 %v669, %v668
    %702 = vmatpush.bf16.msra.mxu0 %v677
    %703 = vmatpush.bf16.msra.mxu0 %v676
    %704 = vmatpush.bf16.msra.mxu0 %v675
    %705 = vmatpush.bf16.msra.mxu0 %v674
    %706 = vmatpush.bf16.msra.mxu0 %v673
    %707 = vmatpush.bf16.msra.mxu0 %v672
    %708 = vmatpush.bf16.msra.mxu0 %v671
    %709 = vmatpush.bf16.msra.mxu0 %v670
    %710 = vmatmul.bf16.gmra.mxu0 %v572
    %v711 = vpop.f32.mrf.mxu0
    %v712 = vadd.f32 0.0, %v711
    %v713 = vpop.f32.mrf.mxu0
    %v714 = vadd.f32 0.0, %v713
    %715 = vdwg.mxu0
    %716 = vmatpush.bf16.msra.mxu0 %v685
    %717 = vmatpush.bf16.msra.mxu0 %v684
    %718 = vmatpush.bf16.msra.mxu0 %v683
    %719 = vmatpush.bf16.msra.mxu0 %v682
    %720 = vmatpush.bf16.msra.mxu0 %v681
    %721 = vmatpush.bf16.msra.mxu0 %v680
    %722 = vmatpush.bf16.msra.mxu0 %v679
    %723 = vmatpush.bf16.msra.mxu0 %v678
    %724 = vmatmul.bf16.gmra.mxu0 %v573
    %v725 = vpop.f32.mrf.mxu0
    %v726 = vadd.f32 %v712, %v725
    %v727 = vpop.f32.mrf.mxu0
    %v728 = vadd.f32 %v714, %v727
    %729 = vdwg.mxu0
    %v730 = vmax.f32 %v726, 0.0
    %v731 = vmax.f32 %v728, 0.0
    %v732 = vpack.c.bf16 %v730, %v730
    %v733 = vpack.c.bf16 %v731, %v731
    %v736 = vrot.slane %v732, 3
    %v737 = vrot.slane %v733, 3
    %v740 = vsel %vm123, %v732, %v736
    %v742 = vsel %vm128, %v732, %v736
    %v744 = vrot.slane %v742, 1
    %v745 = vsel %vm132, %v732, %v736
    %v747 = vrot.slane %v745, 2
    %v748 = vsel %vm136, %v732, %v736
    %v750 = vrot.slane %v748, 3
    %v753 = vsel %vm123, %v733, %v737
    %v755 = vsel %vm128, %v733, %v737
    %v757 = vrot.slane %v755, 1
    %v758 = vsel %vm132, %v733, %v737
    %v760 = vrot.slane %v758, 2
    %v761 = vunpack.i.l.s16 %v740
    %v762 = vunpack.i.h.s16 %v740
    %v763 = vunpack.i.l.s16 %v744
    %v764 = vunpack.i.h.s16 %v744
    %v765 = vunpack.i.l.s16 %v747
    %v766 = vunpack.i.h.s16 %v747
    %v767 = vunpack.i.l.s16 %v750
    %v768 = vunpack.i.h.s16 %v750
    %v769 = vunpack.i.l.s16 %v753
    %v770 = vunpack.i.h.s16 %v753
    %v771 = vunpack.i.l.s16 %v757
    %v772 = vunpack.i.h.s16 %v757
    %v773 = vunpack.i.l.s16 %v760
    %v774 = vunpack.i.h.s16 %v760
    %v775 = vld [vmem:[%s5] sm:$0xff]
    %v776 = vld [vmem:[%s5 + $0x8] sm:$0xff]
    %v777 = vld [vmem:[%s5 + $0x10] sm:$0xff]
    %v778 = vld [vmem:[%s5 + $0x18] sm:$0xff]
    %v779 = vld [vmem:[%s5 + $0x20] sm:$0xff]
    %v780 = vld [vmem:[%s5 + $0x28] sm:$0xff]
    %v781 = vld [vmem:[%s5 + $0x30] sm:$0xff]
    %v782 = vld [vmem:[%s5 + $0x38] sm:$0xff]
    %v783 = vld [vmem:[%s5 + $0x40] sm:$0xff]
    %v784 = vld [vmem:[%s5 + $0x48] sm:$0xff]
    %v785 = vld [vmem:[%s5 + $0x50] sm:$0xff]
    %v786 = vld [vmem:[%s5 + $0x58] sm:$0xff]
    %v787 = vld [vmem:[%s5 + $0x60] sm:$0xff]
    %v788 = vld [vmem:[%s5 + $0x68] sm:$0xff]
    %v789 = vld [vmem:[%s5 + $0x70] sm:$0xff]
    %v790 = vld [vmem:[%s5 + $0x78] sm:$0xff]
    %v791 = vld [vmem:[%s5 + $0x80] sm:$0xff]
    %v792 = vld [vmem:[%s5 + $0x88] sm:$0xff]
    %v793 = vld [vmem:[%s5 + $0x90] sm:$0xff]
    %v794 = vld [vmem:[%s5 + $0x98] sm:$0xff]
    %v795 = vld [vmem:[%s5 + $0xa0] sm:$0xff]
    %v796 = vld [vmem:[%s5 + $0xa8] sm:$0xff]
    %v797 = vld [vmem:[%s5 + $0xb0] sm:$0xff]
    %v798 = vld [vmem:[%s5 + $0xb8] sm:$0xff]
    %v799 = vld [vmem:[%s5 + $0xc0] sm:$0xff]
    %v800 = vld [vmem:[%s5 + $0xc8] sm:$0xff]
    %v801 = vld [vmem:[%s5 + $0xd0] sm:$0xff]
    %v802 = vld [vmem:[%s5 + $0xd8] sm:$0xff]
    %v803 = vld [vmem:[%s5 + $0xe0] sm:$0xff]
    %v804 = vld [vmem:[%s5 + $0xe8] sm:$0xff]
    %v805 = vld [vmem:[%s5 + $0xf0] sm:$0xff]
    %v806 = vld [vmem:[%s5 + $0xf8] sm:$0xff]
    %v807 = vld [vmem:[#allocation7] sm:$0xff]
    %v808 = vld [vmem:[#allocation7 + $0x8] sm:$0xff]
    %v809 = vld [vmem:[#allocation7 + $0x10] sm:$0xff]
    %v810 = vld [vmem:[#allocation7 + $0x18] sm:$0xff]
    %v811 = vld [vmem:[#allocation7 + $0x20] sm:$0xff]
    %v812 = vld [vmem:[#allocation7 + $0x28] sm:$0xff]
    %v813 = vld [vmem:[#allocation7 + $0x30] sm:$0xff]
    %v814 = vld [vmem:[#allocation7 + $0x38] sm:$0xff]
    %v815 = vld [vmem:[#allocation7 + $0x40] sm:$0xff]
    %v816 = vld [vmem:[#allocation7 + $0x48] sm:$0xff]
    %v817 = vld [vmem:[#allocation7 + $0x50] sm:$0xff]
    %v818 = vld [vmem:[#allocation7 + $0x58] sm:$0xff]
    %v819 = vld [vmem:[#allocation7 + $0x60] sm:$0xff]
    %v820 = vld [vmem:[#allocation7 + $0x68] sm:$0xff]
    %v821 = vld [vmem:[#allocation7 + $0x70] sm:$0xff]
    %v822 = vld [vmem:[#allocation7 + $0x78] sm:$0xff]
    %v823 = vld [vmem:[#allocation7 + $0x80] sm:$0xff]
    %v824 = vld [vmem:[#allocation7 + $0x88] sm:$0xff]
    %v825 = vld [vmem:[#allocation7 + $0x90] sm:$0xff]
    %v826 = vld [vmem:[#allocation7 + $0x98] sm:$0xff]
    %v827 = vld [vmem:[#allocation7 + $0xa0] sm:$0xff]
    %v828 = vld [vmem:[#allocation7 + $0xa8] sm:$0xff]
    %v829 = vld [vmem:[#allocation7 + $0xb0] sm:$0xff]
    %v830 = vld [vmem:[#allocation7 + $0xb8] sm:$0xff]
    %v831 = vld [vmem:[#allocation7 + $0xc0] sm:$0xff]
    %v832 = vld [vmem:[#allocation7 + $0xc8] sm:$0xff]
    %v833 = vld [vmem:[#allocation7 + $0xd0] sm:$0xff]
    %v834 = vld [vmem:[#allocation7 + $0xd8] sm:$0xff]
    %v835 = vld [vmem:[#allocation7 + $0xe0] sm:$0xff]
    %v836 = vld [vmem:[#allocation7 + $0xe8] sm:$0xff]
    %v837 = vld [vmem:[#allocation7 + $0xf0] sm:$0xff]
    %v838 = vld [vmem:[#allocation7 + $0xf8] sm:$0xff]
    %v839 = vpack.i.b16 %v763, %v762
    %v840 = vpack.i.b16 %v765, %v764
    %v841 = vpack.i.b16 %v767, %v766
    %v842 = vpack.i.b16 %v770, %v769
    %v843 = vpack.i.b16 %v772, %v771
    %v844 = vpack.i.b16 %v774, %v773
    %846 = vst [vmem:[#allocation1] ss:$9 sm:$0xff] %v839
    %s848 = scalar_lea.vmem [#allocation1], 1
    %849 = vst [vmem:[%s848] ss:$9 sm:$0xff] %v840
    %s851 = scalar_lea.vmem [#allocation1], 2
    %852 = vst [vmem:[%s851] ss:$9 sm:$0xff] %v841
    %s854 = scalar_lea.vmem [#allocation1], 3
    %855 = vst [vmem:[%s854] ss:$9 sm:$0xff] %v842
    %s857 = scalar_lea.vmem [#allocation1], 4
    %858 = vst [vmem:[%s857] ss:$9 sm:$0xff] %v843
    %s860 = scalar_lea.vmem [#allocation1], 5
    %861 = vst [vmem:[%s860] ss:$9 sm:$0xff] %v844
    %v862 = vld [vmem:[#allocation1] sm:$0xff]
    %v896 = vunpack.c.l.b16 %v807
    %v897 = vunpack.c.h.b16 %v807
    %v898 = vunpack.c.l.b16 %v808
    %v899 = vunpack.c.h.b16 %v808
    %v900 = vunpack.c.l.b16 %v809
    %v901 = vunpack.c.h.b16 %v809
    %v902 = vunpack.c.l.b16 %v810
    %v903 = vunpack.c.h.b16 %v810
    %v904 = vunpack.c.l.b16 %v811
    %v905 = vunpack.c.h.b16 %v811
    %v906 = vunpack.c.l.b16 %v812
    %v907 = vunpack.c.h.b16 %v812
    %v908 = vunpack.c.l.b16 %v813
    %v909 = vunpack.c.h.b16 %v813
    %v910 = vunpack.c.l.b16 %v814
    %v911 = vunpack.c.h.b16 %v814
    %v912 = vunpack.c.l.b16 %v815
    %v913 = vunpack.c.h.b16 %v815
    %v914 = vunpack.c.l.b16 %v816
    %v915 = vunpack.c.h.b16 %v816
    %v916 = vunpack.c.l.b16 %v817
    %v917 = vunpack.c.h.b16 %v817
    %v918 = vunpack.c.l.b16 %v818
    %v919 = vunpack.c.h.b16 %v818
    %v920 = vunpack.c.l.b16 %v819
    %v921 = vunpack.c.h.b16 %v819
    %v922 = vunpack.c.l.b16 %v820
    %v923 = vunpack.c.h.b16 %v820
    %v924 = vunpack.c.l.b16 %v821
    %v925 = vunpack.c.h.b16 %v821
    %v926 = vunpack.c.l.b16 %v822
    %v927 = vunpack.c.h.b16 %v822
    %v928 = vunpack.c.l.b16 %v823
    %v929 = vunpack.c.h.b16 %v823
    %v930 = vunpack.c.l.b16 %v824
    %v931 = vunpack.c.h.b16 %v824
    %v932 = vunpack.c.l.b16 %v825
    %v933 = vunpack.c.h.b16 %v825
    %v934 = vunpack.c.l.b16 %v826
    %v935 = vunpack.c.h.b16 %v826
    %v936 = vunpack.c.l.b16 %v827
    %v937 = vunpack.c.h.b16 %v827
    %v938 = vunpack.c.l.b16 %v828
    %v939 = vunpack.c.h.b16 %v828
    %v940 = vunpack.c.l.b16 %v829
    %v941 = vunpack.c.h.b16 %v829
    %v942 = vunpack.c.l.b16 %v830
    %v943 = vunpack.c.h.b16 %v830
    %v944 = vunpack.c.l.b16 %v831
    %v945 = vunpack.c.h.b16 %v831
    %v946 = vunpack.c.l.b16 %v832
    %v947 = vunpack.c.h.b16 %v832
    %v948 = vunpack.c.l.b16 %v833
    %v949 = vunpack.c.h.b16 %v833
    %v950 = vunpack.c.l.b16 %v834
    %v951 = vunpack.c.h.b16 %v834
    %v952 = vunpack.c.l.b16 %v835
    %v953 = vunpack.c.h.b16 %v835
    %v954 = vunpack.c.l.b16 %v836
    %v955 = vunpack.c.h.b16 %v836
    %v956 = vunpack.c.l.b16 %v837
    %v957 = vunpack.c.h.b16 %v837
    %v958 = vunpack.c.l.b16 %v838
    %v959 = vunpack.c.h.b16 %v838
    %v960 = vpack.c.b16 %v900, %v896
    %v961 = vpack.c.b16 %v901, %v897
    %v962 = vpack.c.b16 %v902, %v898
    %v963 = vpack.c.b16 %v903, %v899
    %v964 = vpack.c.b16 %v908, %v904
    %v965 = vpack.c.b16 %v909, %v905
    %v966 = vpack.c.b16 %v910, %v906
    %v967 = vpack.c.b16 %v911, %v907
    %v968 = vpack.c.b16 %v916, %v912
    %v969 = vpack.c.b16 %v917, %v913
    %v970 = vpack.c.b16 %v918, %v914
    %v971 = vpack.c.b16 %v919, %v915
    %v972 = vpack.c.b16 %v924, %v920
    %v973 = vpack.c.b16 %v925, %v921
    %v974 = vpack.c.b16 %v926, %v922
    %v975 = vpack.c.b16 %v927, %v923
    %v976 = vpack.c.b16 %v932, %v928
    %v977 = vpack.c.b16 %v933, %v929
    %v978 = vpack.c.b16 %v934, %v930
    %v979 = vpack.c.b16 %v935, %v931
    %v980 = vpack.c.b16 %v940, %v936
    %v981 = vpack.c.b16 %v941, %v937
    %v982 = vpack.c.b16 %v942, %v938
    %v983 = vpack.c.b16 %v943, %v939
    %v984 = vpack.c.b16 %v948, %v944
    %v985 = vpack.c.b16 %v949, %v945
    %v986 = vpack.c.b16 %v950, %v946
    %v987 = vpack.c.b16 %v951, %v947
    %v988 = vpack.c.b16 %v956, %v952
    %v989 = vpack.c.b16 %v957, %v953
    %v990 = vpack.c.b16 %v958, %v954
    %v991 = vpack.c.b16 %v959, %v955
    %1024 = vmatpush.bf16.msra.mxu0 %v988
    %1025 = vmatpush.bf16.msra.mxu0 %v984
    %1026 = vmatpush.bf16.msra.mxu0 %v980
    %1027 = vmatpush.bf16.msra.mxu0 %v976
    %1028 = vmatpush.bf16.msra.mxu0 %v972
    %1029 = vmatpush.bf16.msra.mxu0 %v968
    %1030 = vmatpush.bf16.msra.mxu0 %v964
    %1031 = vmatpush.bf16.msra.mxu0 %v960
    %1032 = vmatmul.bf16.gmra.mxu0 %v862
    %v1033 = vpop.f32.mrf.mxu0
    %v1034 = vadd.f32 0.0, %v1033
    %v1035 = vpop.f32.mrf.mxu0
    %v1036 = vadd.f32 0.0, %v1035
    %1037 = vdwg.mxu0
    %1038 = vmatpush.bf16.msra.mxu0 %v989
    %1039 = vmatpush.bf16.msra.mxu0 %v985
    %1040 = vmatpush.bf16.msra.mxu0 %v981
    %1041 = vmatpush.bf16.msra.mxu0 %v977
    %1042 = vmatpush.bf16.msra.mxu0 %v973
    %1043 = vmatpush.bf16.msra.mxu0 %v969
    %1044 = vmatpush.bf16.msra.mxu0 %v965
    %1045 = vmatpush.bf16.msra.mxu0 %v961
    %1046 = vmatmul.bf16.gmra.mxu0 %v862
    %v1047 = vpop.f32.mrf.mxu0
    %v1048 = vadd.f32 0.0, %v1047
    %v1049 = vpop.f32.mrf.mxu0
    %v1050 = vadd.f32 0.0, %v1049
    %1051 = vdwg.mxu0
    %1052 = vmatpush.bf16.msra.mxu0 %v990
    %1053 = vmatpush.bf16.msra.mxu0 %v986
    %1054 = vmatpush.bf16.msra.mxu0 %v982
    %1055 = vmatpush.bf16.msra.mxu0 %v978
    %1056 = vmatpush.bf16.msra.mxu0 %v974
    %1057 = vmatpush.bf16.msra.mxu0 %v970
    %1058 = vmatpush.bf16.msra.mxu0 %v966
    %1059 = vmatpush.bf16.msra.mxu0 %v962
    %1060 = vmatmul.bf16.gmra.mxu0 %v862
    %v1061 = vpop.f32.mrf.mxu0
    %v1062 = vadd.f32 0.0, %v1061
    %v1063 = vpop.f32.mrf.mxu0
    %v1064 = vadd.f32 0.0, %v1063
    %1065 = vdwg.mxu0
    %1066 = vmatpush.bf16.msra.mxu0 %v991
    %1067 = vmatpush.bf16.msra.mxu0 %v987
    %1068 = vmatpush.bf16.msra.mxu0 %v983
    %1069 = vmatpush.bf16.msra.mxu0 %v979
    %1070 = vmatpush.bf16.msra.mxu0 %v975
    %1071 = vmatpush.bf16.msra.mxu0 %v971
    %1072 = vmatpush.bf16.msra.mxu0 %v967
    %1073 = vmatpush.bf16.msra.mxu0 %v963
    %1074 = vmatmul.bf16.gmra.mxu0 %v862
    %v1075 = vpop.f32.mrf.mxu0
    %v1076 = vadd.f32 0.0, %v1075
    %v1077 = vpop.f32.mrf.mxu0
    %v1078 = vadd.f32 0.0, %v1077
    %1079 = vdwg.mxu0
    %v1080 = vpack.i.b16 %v762, %v761
    %v1081 = vpack.i.b16 %v764, %v763
    %v1082 = vpack.i.b16 %v766, %v765
    %v1083 = vpack.i.b16 %v769, %v768
    %v1084 = vpack.i.b16 %v771, %v770
    %v1085 = vpack.i.b16 %v773, %v772
    %1087 = vst [vmem:[#allocation1] ss:$9 sm:$0xff] %v1080
    %s1089 = scalar_lea.vmem [#allocation1], 1
    %1090 = vst [vmem:[%s1089] ss:$9 sm:$0xff] %v1081
    %s1092 = scalar_lea.vmem [#allocation1], 2
    %1093 = vst [vmem:[%s1092] ss:$9 sm:$0xff] %v1082
    %s1095 = scalar_lea.vmem [#allocation1], 3
    %1096 = vst [vmem:[%s1095] ss:$9 sm:$0xff] %v1083
    %s1098 = scalar_lea.vmem [#allocation1], 4
    %1099 = vst [vmem:[%s1098] ss:$9 sm:$0xff] %v1084
    %s1101 = scalar_lea.vmem [#allocation1], 5
    %1102 = vst [vmem:[%s1101] ss:$9 sm:$0xff] %v1085
    %v1103 = vld [vmem:[#allocation1] sm:$0xff]
    %v1137 = vunpack.c.l.b16 %v775
    %v1138 = vunpack.c.h.b16 %v775
    %v1139 = vunpack.c.l.b16 %v776
    %v1140 = vunpack.c.h.b16 %v776
    %v1141 = vunpack.c.l.b16 %v777
    %v1142 = vunpack.c.h.b16 %v777
    %v1143 = vunpack.c.l.b16 %v778
    %v1144 = vunpack.c.h.b16 %v778
    %v1145 = vunpack.c.l.b16 %v779
    %v1146 = vunpack.c.h.b16 %v779
    %v1147 = vunpack.c.l.b16 %v780
    %v1148 = vunpack.c.h.b16 %v780
    %v1149 = vunpack.c.l.b16 %v781
    %v1150 = vunpack.c.h.b16 %v781
    %v1151 = vunpack.c.l.b16 %v782
    %v1152 = vunpack.c.h.b16 %v782
    %v1153 = vunpack.c.l.b16 %v783
    %v1154 = vunpack.c.h.b16 %v783
    %v1155 = vunpack.c.l.b16 %v784
    %v1156 = vunpack.c.h.b16 %v784
    %v1157 = vunpack.c.l.b16 %v785
    %v1158 = vunpack.c.h.b16 %v785
    %v1159 = vunpack.c.l.b16 %v786
    %v1160 = vunpack.c.h.b16 %v786
    %v1161 = vunpack.c.l.b16 %v787
    %v1162 = vunpack.c.h.b16 %v787
    %v1163 = vunpack.c.l.b16 %v788
    %v1164 = vunpack.c.h.b16 %v788
    %v1165 = vunpack.c.l.b16 %v789
    %v1166 = vunpack.c.h.b16 %v789
    %v1167 = vunpack.c.l.b16 %v790
    %v1168 = vunpack.c.h.b16 %v790
    %v1169 = vunpack.c.l.b16 %v791
    %v1170 = vunpack.c.h.b16 %v791
    %v1171 = vunpack.c.l.b16 %v792
    %v1172 = vunpack.c.h.b16 %v792
    %v1173 = vunpack.c.l.b16 %v793
    %v1174 = vunpack.c.h.b16 %v793
    %v1175 = vunpack.c.l.b16 %v794
    %v1176 = vunpack.c.h.b16 %v794
    %v1177 = vunpack.c.l.b16 %v795
    %v1178 = vunpack.c.h.b16 %v795
    %v1179 = vunpack.c.l.b16 %v796
    %v1180 = vunpack.c.h.b16 %v796
    %v1181 = vunpack.c.l.b16 %v797
    %v1182 = vunpack.c.h.b16 %v797
    %v1183 = vunpack.c.l.b16 %v798
    %v1184 = vunpack.c.h.b16 %v798
    %v1185 = vunpack.c.l.b16 %v799
    %v1186 = vunpack.c.h.b16 %v799
    %v1187 = vunpack.c.l.b16 %v800
    %v1188 = vunpack.c.h.b16 %v800
    %v1189 = vunpack.c.l.b16 %v801
    %v1190 = vunpack.c.h.b16 %v801
    %v1191 = vunpack.c.l.b16 %v802
    %v1192 = vunpack.c.h.b16 %v802
    %v1193 = vunpack.c.l.b16 %v803
    %v1194 = vunpack.c.h.b16 %v803
    %v1195 = vunpack.c.l.b16 %v804
    %v1196 = vunpack.c.h.b16 %v804
    %v1197 = vunpack.c.l.b16 %v805
    %v1198 = vunpack.c.h.b16 %v805
    %v1199 = vunpack.c.l.b16 %v806
    %v1200 = vunpack.c.h.b16 %v806
    %v1201 = vpack.c.b16 %v1141, %v1137
    %v1202 = vpack.c.b16 %v1142, %v1138
    %v1203 = vpack.c.b16 %v1143, %v1139
    %v1204 = vpack.c.b16 %v1144, %v1140
    %v1205 = vpack.c.b16 %v1149, %v1145
    %v1206 = vpack.c.b16 %v1150, %v1146
    %v1207 = vpack.c.b16 %v1151, %v1147
    %v1208 = vpack.c.b16 %v1152, %v1148
    %v1209 = vpack.c.b16 %v1157, %v1153
    %v1210 = vpack.c.b16 %v1158, %v1154
    %v1211 = vpack.c.b16 %v1159, %v1155
    %v1212 = vpack.c.b16 %v1160, %v1156
    %v1213 = vpack.c.b16 %v1165, %v1161
    %v1214 = vpack.c.b16 %v1166, %v1162
    %v1215 = vpack.c.b16 %v1167, %v1163
    %v1216 = vpack.c.b16 %v1168, %v1164
    %v1217 = vpack.c.b16 %v1173, %v1169
    %v1218 = vpack.c.b16 %v1174, %v1170
    %v1219 = vpack.c.b16 %v1175, %v1171
    %v1220 = vpack.c.b16 %v1176, %v1172
    %v1221 = vpack.c.b16 %v1181, %v1177
    %v1222 = vpack.c.b16 %v1182, %v1178
    %v1223 = vpack.c.b16 %v1183, %v1179
    %v1224 = vpack.c.b16 %v1184, %v1180
    %v1225 = vpack.c.b16 %v1189, %v1185
    %v1226 = vpack.c.b16 %v1190, %v1186
    %v1227 = vpack.c.b16 %v1191, %v1187
    %v1228 = vpack.c.b16 %v1192, %v1188
    %v1229 = vpack.c.b16 %v1197, %v1193
    %v1230 = vpack.c.b16 %v1198, %v1194
    %v1231 = vpack.c.b16 %v1199, %v1195
    %v1232 = vpack.c.b16 %v1200, %v1196
    %1265 = vmatpush.bf16.msra.mxu0 %v1229
    %1266 = vmatpush.bf16.msra.mxu0 %v1225
    %1267 = vmatpush.bf16.msra.mxu0 %v1221
    %1268 = vmatpush.bf16.msra.mxu0 %v1217
    %1269 = vmatpush.bf16.msra.mxu0 %v1213
    %1270 = vmatpush.bf16.msra.mxu0 %v1209
    %1271 = vmatpush.bf16.msra.mxu0 %v1205
    %1272 = vmatpush.bf16.msra.mxu0 %v1201
    %1273 = vmatmul.bf16.gmra.mxu0 %v1103
    %v1274 = vpop.f32.mrf.mxu0
    %v1275 = vadd.f32 %v1034, %v1274
    %v1276 = vpop.f32.mrf.mxu0
    %v1277 = vadd.f32 %v1036, %v1276
    %1278 = vdwg.mxu0
    %1279 = vmatpush.bf16.msra.mxu0 %v1230
    %1280 = vmatpush.bf16.msra.mxu0 %v1226
    %1281 = vmatpush.bf16.msra.mxu0 %v1222
    %1282 = vmatpush.bf16.msra.mxu0 %v1218
    %1283 = vmatpush.bf16.msra.mxu0 %v1214
    %1284 = vmatpush.bf16.msra.mxu0 %v1210
    %1285 = vmatpush.bf16.msra.mxu0 %v1206
    %1286 = vmatpush.bf16.msra.mxu0 %v1202
    %1287 = vmatmul.bf16.gmra.mxu0 %v1103
    %v1288 = vpop.f32.mrf.mxu0
    %v1289 = vadd.f32 %v1048, %v1288
    %v1290 = vpop.f32.mrf.mxu0
    %v1291 = vadd.f32 %v1050, %v1290
    %1292 = vdwg.mxu0
    %1293 = vmatpush.bf16.msra.mxu0 %v1231
    %1294 = vmatpush.bf16.msra.mxu0 %v1227
    %1295 = vmatpush.bf16.msra.mxu0 %v1223
    %1296 = vmatpush.bf16.msra.mxu0 %v1219
    %1297 = vmatpush.bf16.msra.mxu0 %v1215
    %1298 = vmatpush.bf16.msra.mxu0 %v1211
    %1299 = vmatpush.bf16.msra.mxu0 %v1207
    %1300 = vmatpush.bf16.msra.mxu0 %v1203
    %1301 = vmatmul.bf16.gmra.mxu0 %v1103
    %v1302 = vpop.f32.mrf.mxu0
    %v1303 = vadd.f32 %v1062, %v1302
    %v1304 = vpop.f32.mrf.mxu0
    %v1305 = vadd.f32 %v1064, %v1304
    %1306 = vdwg.mxu0
    %1307 = vmatpush.bf16.msra.mxu0 %v1232
    %1308 = vmatpush.bf16.msra.mxu0 %v1228
    %1309 = vmatpush.bf16.msra.mxu0 %v1224
    %1310 = vmatpush.bf16.msra.mxu0 %v1220
    %1311 = vmatpush.bf16.msra.mxu0 %v1216
    %1312 = vmatpush.bf16.msra.mxu0 %v1212
    %1313 = vmatpush.bf16.msra.mxu0 %v1208
    %1314 = vmatpush.bf16.msra.mxu0 %v1204
    %1315 = vmatmul.bf16.gmra.mxu0 %v1103
    %v1316 = vpop.f32.mrf.mxu0
    %v1317 = vadd.f32 %v1076, %v1316
    %v1318 = vpop.f32.mrf.mxu0
    %v1319 = vadd.f32 %v1078, %v1318
    %1320 = vdwg.mxu0
    %v1321 = vld [vmem:[%s7] sm:$0xf]
    %v1323 = vperm.slane %v1321, 0
    %v1324 = vperm.slane %v1321, 1
    %v1325 = vperm.slane %v1321, 2
    %v1326 = vperm.slane %v1321, 3
    %v1331 = vadd.f32 %v1275, %v1323
    %v1332 = vadd.f32 %v1289, %v1324
    %v1333 = vadd.f32 %v1303, %v1325
    %v1334 = vadd.f32 %v1317, %v1326
    %v1335 = vadd.f32 %v1277, %v1323
    %v1336 = vadd.f32 %v1291, %v1324
    %v1337 = vadd.f32 %v1305, %v1325
    %v1338 = vadd.f32 %v1319, %v1326
    %v1339 = vmul.f32 %v1333, 0.5
    %v1340 = vmul.f32 %v1334, 0.5
    %v1341 = vmul.f32 %v1337, 0.5
    %v1342 = vmul.f32 %v1338, 0.5
    %v1343 = vtanh.pop %v1339
    %v1344 = vtanh.pop %v1340
    %v1345 = vtanh.pop %v1341
    %v1346 = vtanh.pop %v1342
    %v1347 = vmul.f32 %v1343, 0.5
    %v1348 = vmul.f32 %v1344, 0.5
    %v1349 = vmul.f32 %v1345, 0.5
    %v1350 = vmul.f32 %v1346, 0.5
    %v1351 = vadd.f32 %v1347, 0.5
    %v1352 = vadd.f32 %v1348, 0.5
    %v1353 = vadd.f32 %v1349, 0.5
    %v1354 = vadd.f32 %v1350, 0.5
    %v1355 = vmul.f32 %v1331, %v1351
    %v1356 = vmul.f32 %v1332, %v1352
    %v1357 = vmul.f32 %v1335, %v1353
    %v1358 = vmul.f32 %v1336, %v1354
    %vm1359 = vcmask 1043456
    %v1360 = vsel %vm1359, %v1357, 0.0
    %v1361 = vadd.f32 %v1355, %v1360
    %v1362 = vrot.slane %v1361, 4
    %v1363 = vadd.f32 %v1361, %v1362
    %v1364 = vrot.slane %v1363, 2
    %v1365 = vadd.f32 %v1363, %v1364
    %v1366 = vrot.slane %v1365, 1
    %v1367 = vadd.f32 %v1365, %v1366
    %v1368 = vsel %vm1359, %v1358, 0.0
    %v1369 = vadd.f32 %v1356, %v1368
    %v1370 = vrot.slane %v1369, 4
    %v1371 = vadd.f32 %v1369, %v1370
    %v1372 = vrot.slane %v1371, 2
    %v1373 = vadd.f32 %v1371, %v1372
    %v1374 = vrot.slane %v1373, 1
    %v1375 = vadd.f32 %v1373, %v1374
    %v1376 = vmul.f32 %v1355, %v1355
    %v1377 = vmul.f32 %v1356, %v1356
    %v1378 = vmul.f32 %v1357, %v1357
    %v1379 = vmul.f32 %v1358, %v1358
    %v1380 = vsel %vm1359, %v1378, 0.0
    %v1381 = vadd.f32 %v1376, %v1380
    %v1382 = vrot.slane %v1381, 4
    %v1383 = vadd.f32 %v1381, %v1382
    %v1384 = vrot.slane %v1383, 2
    %v1385 = vadd.f32 %v1383, %v1384
    %v1386 = vrot.slane %v1385, 1
    %v1387 = vadd.f32 %v1385, %v1386
    %v1388 = vsel %vm1359, %v1379, 0.0
    %v1389 = vadd.f32 %v1377, %v1388
    %v1390 = vrot.slane %v1389, 4
    %v1391 = vadd.f32 %v1389, %v1390
    %v1392 = vrot.slane %v1391, 2
    %v1393 = vadd.f32 %v1391, %v1392
    %v1394 = vrot.slane %v1393, 1
    %v1395 = vadd.f32 %v1393, %v1394
    %v1396 = vsel %vm123, %v1367, %v1387
    %v1397 = vsel %vm123, %v1375, %v1395
    %v1398 = vld [vmem:[#allocation9] sm:$0xff]
    %v1399 = vld [vmem:[#allocation9 + $0x8] sm:$0xff]
    %v1400 = vld [vmem:[#allocation9 + $0x10] sm:$0xff]
    %v1401 = vld [vmem:[#allocation9 + $0x18] sm:$0xff]
    %v1402 = vld [vmem:[#allocation9 + $0x20] sm:$0xff]
    %v1403 = vld [vmem:[#allocation9 + $0x28] sm:$0xff]
    %v1404 = vld [vmem:[#allocation9 + $0x30] sm:$0xff]
    %v1405 = vld [vmem:[#allocation9 + $0x38] sm:$0xff]
    %v1406 = vld [vmem:[#allocation9 + $0x40] sm:$0xff]
    %v1407 = vld [vmem:[#allocation9 + $0x48] sm:$0xff]
    %v1408 = vld [vmem:[#allocation9 + $0x50] sm:$0xff]
    %v1409 = vld [vmem:[#allocation9 + $0x58] sm:$0xff]
    %v1410 = vld [vmem:[#allocation9 + $0x60] sm:$0xff]
    %v1411 = vld [vmem:[#allocation9 + $0x68] sm:$0xff]
    %v1412 = vld [vmem:[#allocation9 + $0x70] sm:$0xff]
    %v1413 = vld [vmem:[#allocation9 + $0x78] sm:$0xff]
    %v1414 = vld [vmem:[#allocation9 + $0x80] sm:$0xff]
    %v1415 = vld [vmem:[#allocation9 + $0x88] sm:$0xff]
    %v1416 = vld [vmem:[#allocation9 + $0x90] sm:$0xff]
    %v1417 = vld [vmem:[#allocation9 + $0x98] sm:$0xff]
    %v1418 = vld [vmem:[#allocation9 + $0xa0] sm:$0xff]
    %v1419 = vld [vmem:[#allocation9 + $0xa8] sm:$0xff]
    %v1420 = vld [vmem:[#allocation9 + $0xb0] sm:$0xff]
    %v1421 = vld [vmem:[#allocation9 + $0xb8] sm:$0xff]
    %v1422 = vld [vmem:[#allocation9 + $0xc0] sm:$0xff]
    %v1423 = vld [vmem:[#allocation9 + $0xc8] sm:$0xff]
    %v1424 = vld [vmem:[#allocation9 + $0xd0] sm:$0xff]
    %v1425 = vld [vmem:[#allocation9 + $0xd8] sm:$0xff]
    %v1426 = vld [vmem:[#allocation9 + $0xe0] sm:$0xff]
    %v1427 = vld [vmem:[#allocation9 + $0xe8] sm:$0xff]
    %v1428 = vld [vmem:[#allocation9 + $0xf0] sm:$0xff]
    %v1429 = vld [vmem:[#allocation9 + $0xf8] sm:$0xff]
    %v1430 = vld [vmem:[#allocation9 + $0x100] sm:$0xff]
    %v1431 = vld [vmem:[#allocation9 + $0x108] sm:$0xff]
    %v1432 = vld [vmem:[#allocation9 + $0x110] sm:$0xff]
    %v1433 = vld [vmem:[#allocation9 + $0x118] sm:$0xff]
    %v1434 = vld [vmem:[#allocation9 + $0x120] sm:$0xff]
    %v1435 = vld [vmem:[#allocation9 + $0x128] sm:$0xff]
    %v1436 = vld [vmem:[#allocation9 + $0x130] sm:$0xff]
    %v1437 = vld [vmem:[#allocation9 + $0x138] sm:$0xff]
    %v1438 = vld [vmem:[#allocation9 + $0x140] sm:$0xff]
    %v1439 = vld [vmem:[#allocation9 + $0x148] sm:$0xff]
    %v1440 = vld [vmem:[#allocation9 + $0x150] sm:$0xff]
    %v1441 = vld [vmem:[#allocation9 + $0x158] sm:$0xff]
    %v1442 = vld [vmem:[#allocation9 + $0x160] sm:$0xff]
    %v1443 = vld [vmem:[#allocation9 + $0x168] sm:$0xff]
    %v1444 = vld [vmem:[#allocation9 + $0x170] sm:$0xff]
    %v1445 = vld [vmem:[#allocation9 + $0x178] sm:$0xff]
    %v1446 = vld [vmem:[#allocation9 + $0x180] sm:$0xff]
    %v1447 = vld [vmem:[#allocation9 + $0x188] sm:$0xff]
    %v1448 = vld [vmem:[#allocation9 + $0x190] sm:$0xff]
    %v1449 = vld [vmem:[#allocation9 + $0x198] sm:$0xff]
    %v1450 = vld [vmem:[#allocation9 + $0x1a0] sm:$0xff]
    %v1451 = vld [vmem:[#allocation9 + $0x1a8] sm:$0xff]
    %v1452 = vld [vmem:[#allocation9 + $0x1b0] sm:$0xff]
    %v1453 = vld [vmem:[#allocation9 + $0x1b8] sm:$0xff]
    %v1454 = vld [vmem:[#allocation9 + $0x1c0] sm:$0xff]
    %v1455 = vld [vmem:[#allocation9 + $0x1c8] sm:$0xff]
    %v1456 = vld [vmem:[#allocation9 + $0x1d0] sm:$0xff]
    %v1457 = vld [vmem:[#allocation9 + $0x1d8] sm:$0xff]
    %v1458 = vld [vmem:[#allocation9 + $0x1e0] sm:$0xff]
    %v1459 = vld [vmem:[#allocation9 + $0x1e8] sm:$0xff]
    %v1460 = vld [vmem:[#allocation9 + $0x1f0] sm:$0xff]
    %v1461 = vld [vmem:[#allocation9 + $0x1f8] sm:$0xff]
    %1462 = vmatpush.msra.mxu0 %v1428
    %1463 = vmatpush.msra.mxu0 %v1426
    %1464 = vmatpush.msra.mxu0 %v1424
    %1465 = vmatpush.msra.mxu0 %v1422
    %1466 = vmatpush.msra.mxu0 %v1420
    %1467 = vmatpush.msra.mxu0 %v1418
    %1468 = vmatpush.msra.mxu0 %v1416
    %1469 = vmatpush.msra.mxu0 %v1414
    %1470 = vmatpush.msra.mxu0 %v1412
    %1471 = vmatpush.msra.mxu0 %v1410
    %1472 = vmatpush.msra.mxu0 %v1408
    %1473 = vmatpush.msra.mxu0 %v1406
    %1474 = vmatpush.msra.mxu0 %v1404
    %1475 = vmatpush.msra.mxu0 %v1402
    %1476 = vmatpush.msra.mxu0 %v1400
    %1477 = vmatpush.msra.mxu0 %v1398
    %1478 = vmatmul.f32.gmra.mxu0 %v1396
    %v1479 = vpop.f32.mrf.mxu0
    %v1480 = vadd.f32 0.0, %v1479
    %1481 = vdwg.mxu0
    %1482 = vmatpush.msra.mxu0 %v1460
    %1483 = vmatpush.msra.mxu0 %v1458
    %1484 = vmatpush.msra.mxu0 %v1456
    %1485 = vmatpush.msra.mxu0 %v1454
    %1486 = vmatpush.msra.mxu0 %v1452
    %1487 = vmatpush.msra.mxu0 %v1450
    %1488 = vmatpush.msra.mxu0 %v1448
    %1489 = vmatpush.msra.mxu0 %v1446
    %1490 = vmatpush.msra.mxu0 %v1444
    %1491 = vmatpush.msra.mxu0 %v1442
    %1492 = vmatpush.msra.mxu0 %v1440
    %1493 = vmatpush.msra.mxu0 %v1438
    %1494 = vmatpush.msra.mxu0 %v1436
    %1495 = vmatpush.msra.mxu0 %v1434
    %1496 = vmatpush.msra.mxu0 %v1432
    %1497 = vmatpush.msra.mxu0 %v1430
    %1498 = vmatmul.f32.gmra.mxu0 %v1397
    %v1499 = vpop.f32.mrf.mxu0
    %v1500 = vadd.f32 %v1480, %v1499
    %1501 = vdwg.mxu0
    %1502 = vmatpush.msra.mxu0 %v1429
    %1503 = vmatpush.msra.mxu0 %v1427
    %1504 = vmatpush.msra.mxu0 %v1425
    %1505 = vmatpush.msra.mxu0 %v1423
    %1506 = vmatpush.msra.mxu0 %v1421
    %1507 = vmatpush.msra.mxu0 %v1419
    %1508 = vmatpush.msra.mxu0 %v1417
    %1509 = vmatpush.msra.mxu0 %v1415
    %1510 = vmatpush.msra.mxu0 %v1413
    %1511 = vmatpush.msra.mxu0 %v1411
    %1512 = vmatpush.msra.mxu0 %v1409
    %1513 = vmatpush.msra.mxu0 %v1407
    %1514 = vmatpush.msra.mxu0 %v1405
    %1515 = vmatpush.msra.mxu0 %v1403
    %1516 = vmatpush.msra.mxu0 %v1401
    %1517 = vmatpush.msra.mxu0 %v1399
    %1518 = vmatmul.f32.gmra.mxu0 %v1396
    %v1519 = vpop.f32.mrf.mxu0
    %v1520 = vadd.f32 0.0, %v1519
    %1521 = vdwg.mxu0
    %1522 = vmatpush.msra.mxu0 %v1461
    %1523 = vmatpush.msra.mxu0 %v1459
    %1524 = vmatpush.msra.mxu0 %v1457
    %1525 = vmatpush.msra.mxu0 %v1455
    %1526 = vmatpush.msra.mxu0 %v1453
    %1527 = vmatpush.msra.mxu0 %v1451
    %1528 = vmatpush.msra.mxu0 %v1449
    %1529 = vmatpush.msra.mxu0 %v1447
    %1530 = vmatpush.msra.mxu0 %v1445
    %1531 = vmatpush.msra.mxu0 %v1443
    %1532 = vmatpush.msra.mxu0 %v1441
    %1533 = vmatpush.msra.mxu0 %v1439
    %1534 = vmatpush.msra.mxu0 %v1437
    %1535 = vmatpush.msra.mxu0 %v1435
    %1536 = vmatpush.msra.mxu0 %v1433
    %1537 = vmatpush.msra.mxu0 %v1431
    %1538 = vmatmul.f32.gmra.mxu0 %v1397
    %v1539 = vpop.f32.mrf.mxu0
    %v1540 = vadd.f32 %v1520, %v1539
    %1541 = vdwg.mxu0
    %v1542 = vrcp.pop 192.0
    %v1543 = vmul.f32 192.0, %v1542
    %v1544 = vsub.f32 1.0, %v1543
    %v1545 = vmul.f32 %v1542, %v1544
    %v1546 = vadd.f32 %v1542, %v1545
    %vm1547 = vweird.f32 %v1542
    %v1548 = vsel %vm1547, %v1542, %v1546
    %v1549 = vmul.f32 %v1500, %v1548
    %v1550 = vmul.f32 %v1540, %v1548
    %v1551 = vmul.f32 %v1549, %v1549
    %v1552 = vmul.f32 %v1550, %v1550
    %v1555 = vrot.slane %v1551, 7
    %v1556 = vrot.slane %v1552, 7
    %v1559 = vsub.f32 %v1549, %v1555
    %v1560 = vsub.f32 %v1550, %v1556
    %v1561 = vmax.f32 %v1559, 0.0
    %v1562 = vmax.f32 %v1560, 0.0
    %v1563 = vld [vmem:[%s9] sm:$0x3]
    %v1564 = vadd.f32 %v1561, 1e-05
    %v1565 = vadd.f32 %v1562, 1e-05
    %v1566 = vrsqrt.pop %v1564
    %v1567 = vmul.f32 %v1566, %v1564
    %v1568 = vmul.f32 %v1567, %v1566
    %v1569 = vmul.f32 0.5, %v1568
    %v1570 = vsub.f32 1.5, %v1569
    %v1571 = vmul.f32 %v1566, %v1570
    %vm1572 = vweird.f32 %v1564
    %vm1573 = vweird.f32 %v1566
    %vm1574 = vmor %vm1572, %vm1573
    %v1575 = vsel %vm1574, %v1566, %v1571
    %v1576 = vrsqrt.pop %v1565
    %v1577 = vmul.f32 %v1576, %v1565
    %v1578 = vmul.f32 %v1577, %v1576
    %v1579 = vmul.f32 0.5, %v1578
    %v1580 = vsub.f32 1.5, %v1579
    %v1581 = vmul.f32 %v1576, %v1580
    %vm1582 = vweird.f32 %v1565
    %vm1583 = vweird.f32 %v1576
    %vm1584 = vmor %vm1582, %vm1583
    %v1585 = vsel %vm1584, %v1576, %v1581
    %1588 = vst [vmem:[#allocation1] sm:$0xff] %v1575
    %1589 = vst [vmem:[#allocation1 + $0x9] sm:$0xff] %v1585
    %s1590 = scalar_lea.vmem [#allocation1], 1
    %v1591 = vld [vmem:[%s1590] ss:$9 sm:$0xff]
    %v1593 = vmul.f32 %v1563, %v1591
    %v1594 = vperm.slane %v1549, 0
    %v1595 = vperm.slane %v1550, 0
    %v1596 = vsub.f32 %v1355, %v1594
    %v1597 = vsub.f32 %v1356, %v1595
    %v1598 = vsub.f32 %v1357, %v1594
    %v1599 = vsub.f32 %v1358, %v1595
    %v1601 = vperm.slane %v1593, 0
    %v1602 = vperm.slane %v1593, 1
    %v1605 = vmul.f32 %v1596, %v1601
    %v1606 = vmul.f32 %v1597, %v1602
    %v1607 = vmul.f32 %v1598, %v1601
    %v1608 = vmul.f32 %v1599, %v1602
    %v1609 = vld [vmem:[%s10] sm:$0x3]
    %v1611 = vperm.slane %v1609, 0
    %v1612 = vperm.slane %v1609, 1
    %v1615 = vadd.f32 %v1605, %v1611
    %v1616 = vadd.f32 %v1606, %v1612
    %v1617 = vadd.f32 %v1607, %v1611
    %v1618 = vadd.f32 %v1608, %v1612
    %1619 = vst [vmem:[%s11] sm:$0xff] %v1615
    %1620 = vst [vmem:[%s11 + $0x8] sm:$0xff] %v1616
    %1621 = vst [vmem:[%s11 + $0x10] sm:$0xf] %v1617
    %1622 = vst [vmem:[%s11 + $0x18] sm:$0xf] %v1618
    // Predicated region
    $region66: #{stgcn_block_forward.1} parent=1 // pred_check
      _
    $region67: #{stgcn_block_forward.1} parent=1 // pred_check_branch
      %1624 = sbr.rel (0) target = $region69
    $region68: #{stgcn_block_forward.1} parent=1 // pred_region
      _
    $region69: #{stgcn_block_forward.1} parent=1 // pred_fallthru
      _
    // Predicated region
    $region70: #{stgcn_block_forward.1} parent=1 // pred_check
      _
    $region71: #{stgcn_block_forward.1} parent=1 // pred_check_branch
      %1626 = sbr.rel (0) target = $region73
    $region72: #{stgcn_block_forward.1} parent=1 // pred_region
      _
    $region73: #{stgcn_block_forward.1} parent=1 // pred_fallthru
      _
    %1627 = vsyncpa [#allocation3], 1
    %1628 = vsyncpa [#allocation5], 1
    %1629 = vsyncpa [#allocation8], 1

</llo_original>
